<compile_context>
chip_gen: v5e
topology: v5e:2x2
jax: 0.10.0
libtpu: 0.0.40
codegen_flags: <defaults>
</compile_context>

<pallas_src>
import jax
import jax.numpy as jnp
from jax.experimental import pallas as pl
from jax.experimental.pallas import tpu as pltpu

NOISE = 0.2  # salt-and-pepper corruption amount (module default)
# Random bits are pre-shifted to 24 bits on the host; compare against this
# threshold inside the kernel to decide "replace this pixel".
_THR24 = int(NOISE * (1 << 24))


def _round_up(n, m):
    return ((n + m - 1) // m) * m


def dae_kernel(x_ref, rnd_ref,
               w0_ref, b0_ref, w1_ref, b1_ref,
               wd0_ref, bd0_ref, wd1_ref, bd1_ref,
               out_ref, corrupt_ref):
    # ---- input corruption: SaltAndPepper(amount=NOISE) ----------------------
    # rnd is int32 uniform in [0, 2^24): with prob NOISE replace the pixel,
    # salt (1.0) vs pepper (0.0) chosen by the low bit of the same draw.
    x = x_ref[...].astype(jnp.float32)
    rnd = rnd_ref[...]
    replace = rnd < jnp.int32(_THR24)
    salt = (rnd & jnp.int32(1)).astype(jnp.float32)
    corrupted = jnp.where(replace, salt, x)
    corrupt_ref[...] = corrupted

    # ---- encoder: Linear -> ReLU stack (bf16 MXU, f32 accumulation) ---------
    h = jnp.dot(corrupted.astype(jnp.bfloat16), w0_ref[...],
                preferred_element_type=jnp.float32) + b0_ref[...]
    h = jnp.maximum(h, 0.0)
    h = jnp.dot(h.astype(jnp.bfloat16), w1_ref[...],
                preferred_element_type=jnp.float32) + b1_ref[...]
    h = jnp.maximum(h, 0.0)

    # ---- decoder: Linear -> ReLU, last layer Sigmoid (visible_act) ----------
    h = jnp.dot(h.astype(jnp.bfloat16), wd0_ref[...],
                preferred_element_type=jnp.float32) + bd0_ref[...]
    h = jnp.maximum(h, 0.0)
    logits = jnp.dot(h.astype(jnp.bfloat16), wd1_ref[...],
                     preferred_element_type=jnp.float32) + bd1_ref[...]
    out_ref[...] = jax.nn.sigmoid(logits)


def dae_forward(x, params, seed, *, tile_b=256):
    """Returns (reconstruction, corrupted_input), both (B, D) float32."""
    B = x.shape[0]
    x2d = x.reshape(B, -1).astype(jnp.float32) if x.ndim > 2 else x.astype(jnp.float32)
    D = x2d.shape[1]

    w0, b0, w1, b1, wd0, bd0, wd1, bd1 = params
    H1, H2 = w0.shape[1], w1.shape[1]
    H1p, H2p = _round_up(H1, 128), _round_up(H2, 128)

    def pad_w(w, rows, cols):  # zero-pad + bf16 cast (padding is numerically exact)
        return jnp.pad(w, ((0, rows - w.shape[0]), (0, cols - w.shape[1]))
                       ).astype(jnp.bfloat16)

    def pad_b(b, cols):
        return jnp.pad(b, ((0, 0), (0, cols - b.shape[1]))).astype(jnp.float32)

    w0p, b0p = pad_w(w0, D, H1p), pad_b(b0, H1p)
    w1p, b1p = pad_w(w1, H1p, H2p), pad_b(b1, H2p)
    wd0p, bd0p = pad_w(wd0, H2p, H1p), pad_b(bd0, H1p)
    wd1p, bd1p = pad_w(wd1, H1p, D), pad_b(bd1, D)

    # Batch tiling: tile_b a multiple of 8 sublanes, batch padded to tile_b.
    tile_b = _round_up(max(8, min(tile_b, _round_up(B, 8))), 8)
    Bp = _round_up(B, tile_b)
    x_pad = jnp.pad(x2d, ((0, Bp - B), (0, 0))) if Bp != B else x2d

    # One random draw per element, pre-shifted to 24 bits (int32-safe compare).
    rbits = jax.random.bits(jax.random.PRNGKey(seed), (Bp, D), dtype=jnp.uint32)
    rnd = (rbits >> jnp.uint32(8)).astype(jnp.int32)

    row_spec = pl.BlockSpec((tile_b, D), lambda i: (i, 0))

    def resident(shape):  # weights/biases stay VMEM-resident across batch tiles
        return pl.BlockSpec(shape, lambda i: (0, 0))

    weight_bytes = sum(int(a.size) * a.dtype.itemsize
                       for a in (w0p, b0p, w1p, b1p, wd0p, bd0p, wd1p, bd1p))
    cost = pl.CostEstimate(
        flops=2 * Bp * (D * H1p + H1p * H2p + H2p * H1p + H1p * D),
        transcendentals=Bp * D,
        bytes_accessed=weight_bytes + 4 * Bp * D * 4,  # x, rnd, recon, corrupted
    )

    fn = pl.pallas_call(
        dae_kernel,
        grid=(Bp // tile_b,),
        in_specs=[row_spec, row_spec,
                  resident((D, H1p)), resident((1, H1p)),
                  resident((H1p, H2p)), resident((1, H2p)),
                  resident((H2p, H1p)), resident((1, H1p)),
                  resident((H1p, D)), resident((1, D))],
        out_specs=(row_spec, row_spec),
        out_shape=(jax.ShapeDtypeStruct((Bp, D), jnp.float32),   # reconstruction
                   jax.ShapeDtypeStruct((Bp, D), jnp.float32)),  # corrupted input
        compiler_params=pltpu.CompilerParams(
            dimension_semantics=("parallel",)),
        cost_estimate=cost,
    )
    recon, corrupted = fn(x_pad, rnd, w0p, b0p, w1p, b1p, wd0p, bd0p, wd1p, bd1p)
    return recon[:B], corrupted[:B]


def linear_init(key, fan_in, fan_out):
    # deterministic torch.nn.Linear-style init: U(-1/sqrt(fan_in), 1/sqrt(fan_in))
    kw, kb = jax.random.split(key)
    bound = 1.0 / (fan_in ** 0.5)
    w = jax.random.uniform(kw, (fan_in, fan_out), jnp.float32, -bound, bound)
    b = jax.random.uniform(kb, (1, fan_out), jnp.float32, -bound, bound)
    return w, b


if __name__ == "__main__":
    key = jax.random.PRNGKey(0)
    kx, k0, k1, k2, k3 = jax.random.split(key, 5)

    # x: (B=2, C=4, H=16, W=16) -> flattened D = 1024; sizes = [1024, 128, 32]
    sizes = [4 * 16 * 16, 128, 32]
    w0, b0 = linear_init(k0, sizes[0], sizes[1])    # encode layer 0
    w1, b1 = linear_init(k1, sizes[1], sizes[2])    # encode layer 1
    wd0, bd0 = linear_init(k2, sizes[2], sizes[1])  # decode layer 0 (untied)
    wd1, bd1 = linear_init(k3, sizes[1], sizes[0])  # decode layer 1 (untied)
    params = (w0, b0, w1, b1, wd0, bd0, wd1, bd1)

    x = jax.random.uniform(kx, (2, 4, 16, 16), jnp.float32)  # "image" data in [0,1]

    recon, corrupted = dae_forward(x, params, seed=1234)
    recon, corrupted = jax.block_until_ready((recon, corrupted))

    B, D = 2, sizes[0]
    assert recon.shape == (B, D) and corrupted.shape == (B, D)

    # Sanity 1: corruption is salt-and-pepper — every element is either the
    # original pixel, 0.0 (pepper), or 1.0 (salt); replaced fraction ~ NOISE.
    x2d = x.reshape(B, -1)
    valid = (corrupted == x2d) | (corrupted == 0.0) | (corrupted == 1.0)
    assert bool(jnp.all(valid))
    frac = float(jnp.mean((corrupted != x2d).astype(jnp.float32)))
    assert 0.05 < frac < 0.40, f"unexpected corruption fraction {frac}"

    # Sanity 2: cross-check the deterministic MLP portion against pure JAX
    # (same bf16 rounding), feeding it the corrupted tensor the kernel produced.
    def ref_from_corrupted(c):
        bf = lambda a: a.astype(jnp.bfloat16).astype(jnp.float32)
        h = jnp.maximum(bf(c) @ bf(w0) + b0, 0.0)
        h = jnp.maximum(bf(h) @ bf(w1) + b1, 0.0)
        h = jnp.maximum(bf(h) @ bf(wd0) + bd0, 0.0)
        return jax.nn.sigmoid(bf(h) @ bf(wd1) + bd1)

    ref = ref_from_corrupted(corrupted)
    assert jnp.allclose(recon, ref, atol=1e-2, rtol=1e-2), "mismatch vs JAX reference"
    assert bool(jnp.all((recon >= 0.0) & (recon <= 1.0)))

    print("KERNEL_OK")
</pallas_src>

<mosaic_0001>
module attributes {stable_mosaic.version = 11 : i64} {
  func.func @dae_kernel(%arg0: i32, %arg1: memref<8x1024xf32, #tpu.memory_space<vmem>>, %arg2: memref<8x1024xi32, #tpu.memory_space<vmem>>, %arg3: memref<1024x128xbf16, #tpu.memory_space<vmem>>, %arg4: memref<1x128xf32, #tpu.memory_space<vmem>>, %arg5: memref<128x128xbf16, #tpu.memory_space<vmem>>, %arg6: memref<1x128xf32, #tpu.memory_space<vmem>>, %arg7: memref<128x128xbf16, #tpu.memory_space<vmem>>, %arg8: memref<1x128xf32, #tpu.memory_space<vmem>>, %arg9: memref<128x1024xbf16, #tpu.memory_space<vmem>>, %arg10: memref<1x1024xf32, #tpu.memory_space<vmem>>, %arg11: memref<8x1024xf32, #tpu.memory_space<vmem>>, %arg12: memref<8x1024xf32, #tpu.memory_space<vmem>>) attributes {dimension_semantics = [#tpu.dimension_semantics<parallel>], iteration_bounds = array<i64: 1>, scalar_prefetch = 0 : i64, scratch_operands = 0 : i64, tpu.core_type = #tpu.core_type<tc>, window_params = [{transform_indices = @transform_0, window_bounds = array<i64: 8, 1024>}, {transform_indices = @transform_1, window_bounds = array<i64: 8, 1024>}, {pipeline_mode = #tpu.pipeline_mode<synchronous>, transform_indices = @transform_2, window_bounds = array<i64: 1024, 128>}, {pipeline_mode = #tpu.pipeline_mode<synchronous>, transform_indices = @transform_3, window_bounds = array<i64: 1, 128>}, {pipeline_mode = #tpu.pipeline_mode<synchronous>, transform_indices = @transform_4, window_bounds = array<i64: 128, 128>}, {pipeline_mode = #tpu.pipeline_mode<synchronous>, transform_indices = @transform_5, window_bounds = array<i64: 1, 128>}, {pipeline_mode = #tpu.pipeline_mode<synchronous>, transform_indices = @transform_6, window_bounds = array<i64: 128, 128>}, {pipeline_mode = #tpu.pipeline_mode<synchronous>, transform_indices = @transform_7, window_bounds = array<i64: 1, 128>}, {pipeline_mode = #tpu.pipeline_mode<synchronous>, transform_indices = @transform_8, window_bounds = array<i64: 128, 1024>}, {pipeline_mode = #tpu.pipeline_mode<synchronous>, transform_indices = @transform_9, window_bounds = array<i64: 1, 1024>}, {transform_indices = @transform_10, window_bounds = array<i64: 8, 1024>}, {transform_indices = @transform_11, window_bounds = array<i64: 8, 1024>}]} {
    %c0 = arith.constant 0 : index
    %c0_0 = arith.constant 0 : index
    %0 = vector.load %arg1[%c0, %c0_0] : memref<8x1024xf32, #tpu.memory_space<vmem>>, vector<8x1024xf32>
    %c0_1 = arith.constant 0 : index
    %c0_2 = arith.constant 0 : index
    %1 = vector.load %arg2[%c0_1, %c0_2] : memref<8x1024xi32, #tpu.memory_space<vmem>>, vector<8x1024xi32>
    %c3355443_i32 = arith.constant 3355443 : i32
    %2 = vector.broadcast %c3355443_i32 : i32 to vector<8x1024xi32>
    %3 = arith.cmpi slt, %1, %2 : vector<8x1024xi32>
    %c1_i32 = arith.constant 1 : i32
    %4 = vector.broadcast %c1_i32 : i32 to vector<8x1024xi32>
    %5 = arith.andi %1, %4 : vector<8x1024xi32>
    %6 = arith.sitofp %5 : vector<8x1024xi32> to vector<8x1024xf32>
    %7 = arith.select %3, %6, %0 : vector<8x1024xi1>, vector<8x1024xf32>
    %c0_3 = arith.constant 0 : index
    %c0_4 = arith.constant 0 : index
    %8 = vector.load %arg12[%c0_3, %c0_4] : memref<8x1024xf32, #tpu.memory_space<vmem>>, vector<8x1024xf32>
    tpu.vector_store %arg12[%c0_3, %c0_4], %7 {strides = array<i32>} : memref<8x1024xf32, #tpu.memory_space<vmem>>, vector<8x1024xf32>,
    %9 = arith.truncf %7 : vector<8x1024xf32> to vector<8x1024xbf16>
    %c0_5 = arith.constant 0 : index
    %c0_6 = arith.constant 0 : index
    %10 = vector.load %arg3[%c0_5, %c0_6] : memref<1024x128xbf16, #tpu.memory_space<vmem>>, vector<1024x128xbf16>
    %cst = arith.constant dense<0.000000e+00> : vector<8x128xf32>
    %11 = tpu.matmul %9, %10, %cst {dimension_numbers = #tpu.dot_dimension_numbers<[1], [0], [0], [1], [0, 0, 1, 1], [], []>} : vector<8x1024xbf16>, vector<1024x128xbf16>, vector<8x128xf32> -> vector<8x128xf32>
    %c0_7 = arith.constant 0 : index
    %c0_8 = arith.constant 0 : index
    %12 = vector.load %arg4[%c0_7, %c0_8] : memref<1x128xf32, #tpu.memory_space<vmem>>, vector<1x128xf32>
    %13 = vector.broadcast %12 : vector<1x128xf32> to vector<8x128xf32>
    %14 = arith.addf %11, %13 : vector<8x128xf32>
    %cst_9 = arith.constant 0.000000e+00 : f32
    %15 = vector.broadcast %cst_9 : f32 to vector<8x128xf32>
    %16 = arith.maximumf %14, %15 : vector<8x128xf32>
    %17 = arith.truncf %16 : vector<8x128xf32> to vector<8x128xbf16>
    %c0_10 = arith.constant 0 : index
    %c0_11 = arith.constant 0 : index
    %18 = vector.load %arg5[%c0_10, %c0_11] : memref<128x128xbf16, #tpu.memory_space<vmem>>, vector<128x128xbf16>
    %cst_12 = arith.constant dense<0.000000e+00> : vector<8x128xf32>
    %19 = tpu.matmul %17, %18, %cst_12 {dimension_numbers = #tpu.dot_dimension_numbers<[1], [0], [0], [1], [0, 0, 1, 1], [], []>} : vector<8x128xbf16>, vector<128x128xbf16>, vector<8x128xf32> -> vector<8x128xf32>
    %c0_13 = arith.constant 0 : index
    %c0_14 = arith.constant 0 : index
    %20 = vector.load %arg6[%c0_13, %c0_14] : memref<1x128xf32, #tpu.memory_space<vmem>>, vector<1x128xf32>
    %21 = vector.broadcast %20 : vector<1x128xf32> to vector<8x128xf32>
    %22 = arith.addf %19, %21 : vector<8x128xf32>
    %cst_15 = arith.constant 0.000000e+00 : f32
    %23 = vector.broadcast %cst_15 : f32 to vector<8x128xf32>
    %24 = arith.maximumf %22, %23 : vector<8x128xf32>
    %25 = arith.truncf %24 : vector<8x128xf32> to vector<8x128xbf16>
    %c0_16 = arith.constant 0 : index
    %c0_17 = arith.constant 0 : index
    %26 = vector.load %arg7[%c0_16, %c0_17] : memref<128x128xbf16, #tpu.memory_space<vmem>>, vector<128x128xbf16>
    %cst_18 = arith.constant dense<0.000000e+00> : vector<8x128xf32>
    %27 = tpu.matmul %25, %26, %cst_18 {dimension_numbers = #tpu.dot_dimension_numbers<[1], [0], [0], [1], [0, 0, 1, 1], [], []>} : vector<8x128xbf16>, vector<128x128xbf16>, vector<8x128xf32> -> vector<8x128xf32>
    %c0_19 = arith.constant 0 : index
    %c0_20 = arith.constant 0 : index
    %28 = vector.load %arg8[%c0_19, %c0_20] : memref<1x128xf32, #tpu.memory_space<vmem>>, vector<1x128xf32>
    %29 = vector.broadcast %28 : vector<1x128xf32> to vector<8x128xf32>
    %30 = arith.addf %27, %29 : vector<8x128xf32>
    %cst_21 = arith.constant 0.000000e+00 : f32
    %31 = vector.broadcast %cst_21 : f32 to vector<8x128xf32>
    %32 = arith.maximumf %30, %31 : vector<8x128xf32>
    %33 = arith.truncf %32 : vector<8x128xf32> to vector<8x128xbf16>
    %c0_22 = arith.constant 0 : index
    %c0_23 = arith.constant 0 : index
    %34 = vector.load %arg9[%c0_22, %c0_23] : memref<128x1024xbf16, #tpu.memory_space<vmem>>, vector<128x1024xbf16>
    %cst_24 = arith.constant dense<0.000000e+00> : vector<8x1024xf32>
    %35 = tpu.matmul %33, %34, %cst_24 {dimension_numbers = #tpu.dot_dimension_numbers<[1], [0], [0], [1], [0, 0, 1, 1], [], []>} : vector<8x128xbf16>, vector<128x1024xbf16>, vector<8x1024xf32> -> vector<8x1024xf32>
    %c0_25 = arith.constant 0 : index
    %c0_26 = arith.constant 0 : index
    %36 = vector.load %arg10[%c0_25, %c0_26] : memref<1x1024xf32, #tpu.memory_space<vmem>>, vector<1x1024xf32>
    %37 = vector.broadcast %36 : vector<1x1024xf32> to vector<8x1024xf32>
    %38 = arith.addf %35, %37 : vector<8x1024xf32>
    %39 = arith.negf %38 : vector<8x1024xf32>
    %40 = math.exp %39 : vector<8x1024xf32>
    %cst_27 = arith.constant 1.000000e+00 : f32
    %41 = vector.broadcast %cst_27 : f32 to vector<8x1024xf32>
    %42 = arith.addf %41, %40 : vector<8x1024xf32>
    %43 = arith.divf %41, %42 : vector<8x1024xf32>
    %c0_28 = arith.constant 0 : index
    %c0_29 = arith.constant 0 : index
    %44 = vector.load %arg11[%c0_28, %c0_29] : memref<8x1024xf32, #tpu.memory_space<vmem>>, vector<8x1024xf32>
    tpu.vector_store %arg11[%c0_28, %c0_29], %43 {strides = array<i32>} : memref<8x1024xf32, #tpu.memory_space<vmem>>, vector<8x1024xf32>,
    return
  }
  func.func @transform_0(%arg0: i32) -> (i32, i32) {
    %c0_i32 = arith.constant 0 : i32
    %c0_i32_0 = arith.constant 0 : i32
    return %arg0, %c0_i32 : i32, i32
  }
  func.func @transform_1(%arg0: i32) -> (i32, i32) {
    %c0_i32 = arith.constant 0 : i32
    %c0_i32_0 = arith.constant 0 : i32
    return %arg0, %c0_i32 : i32, i32
  }
  func.func @transform_2(%arg0: i32) -> (i32, i32) {
    %c0_i32 = arith.constant 0 : i32
    %c0_i32_0 = arith.constant 0 : i32
    %c0_i32_1 = arith.constant 0 : i32
    return %c0_i32, %c0_i32_0 : i32, i32
  }
  func.func @transform_3(%arg0: i32) -> (i32, i32) {
    %c0_i32 = arith.constant 0 : i32
    %c0_i32_0 = arith.constant 0 : i32
    %c0_i32_1 = arith.constant 0 : i32
    return %c0_i32, %c0_i32_0 : i32, i32
  }
  func.func @transform_4(%arg0: i32) -> (i32, i32) {
    %c0_i32 = arith.constant 0 : i32
    %c0_i32_0 = arith.constant 0 : i32
    %c0_i32_1 = arith.constant 0 : i32
    return %c0_i32, %c0_i32_0 : i32, i32
  }
  func.func @transform_5(%arg0: i32) -> (i32, i32) {
    %c0_i32 = arith.constant 0 : i32
    %c0_i32_0 = arith.constant 0 : i32
    %c0_i32_1 = arith.constant 0 : i32
    return %c0_i32, %c0_i32_0 : i32, i32
  }
  func.func @transform_6(%arg0: i32) -> (i32, i32) {
    %c0_i32 = arith.constant 0 : i32
    %c0_i32_0 = arith.constant 0 : i32
    %c0_i32_1 = arith.constant 0 : i32
    return %c0_i32, %c0_i32_0 : i32, i32
  }
  func.func @transform_7(%arg0: i32) -> (i32, i32) {
    %c0_i32 = arith.constant 0 : i32
    %c0_i32_0 = arith.constant 0 : i32
    %c0_i32_1 = arith.constant 0 : i32
    return %c0_i32, %c0_i32_0 : i32, i32
  }
  func.func @transform_8(%arg0: i32) -> (i32, i32) {
    %c0_i32 = arith.constant 0 : i32
    %c0_i32_0 = arith.constant 0 : i32
    %c0_i32_1 = arith.constant 0 : i32
    return %c0_i32, %c0_i32_0 : i32, i32
  }
  func.func @transform_9(%arg0: i32) -> (i32, i32) {
    %c0_i32 = arith.constant 0 : i32
    %c0_i32_0 = arith.constant 0 : i32
    %c0_i32_1 = arith.constant 0 : i32
    return %c0_i32, %c0_i32_0 : i32, i32
  }
  func.func @transform_10(%arg0: i32) -> (i32, i32) {
    %c0_i32 = arith.constant 0 : i32
    %c0_i32_0 = arith.constant 0 : i32
    return %arg0, %c0_i32 : i32, i32
  }
  func.func @transform_11(%arg0: i32) -> (i32, i32) {
    %c0_i32 = arith.constant 0 : i32
    %c0_i32_0 = arith.constant 0 : i32
    return %arg0, %c0_i32 : i32, i32
  }
}

</mosaic_0001>

<llo_original>
// kernel: tpu_custom_call.1
$region0: #{tpu_custom_call.1}
  #allocation0 [shape = 'u32[]', space=smem, size = 0x4, offset = 0x4, fixed_abs, tag = 'smem constant byte address 0x4 - core index']
  #allocation1 [shape = 'u32[72,128]{1,0:T(1,128)}', space=vmem, size = 0x9000, scoped, tag = 'internal scratch']
  %s0 = inlined_call_operand.hbm [shape: f32[8,1024], index: 0, kind: input, shape index: {}]
  %s1 = inlined_call_operand.hbm [shape: s32[8,1024], index: 1, kind: input, shape index: {}]
  %s2 = inlined_call_operand.hbm [shape: bf16[1024,128], index: 2, kind: input, shape index: {}]
  %s3 = inlined_call_operand.hbm [shape: f32[1,128], index: 3, kind: input, shape index: {}]
  %s4 = inlined_call_operand.hbm [shape: bf16[128,128], index: 4, kind: input, shape index: {}]
  %s5 = inlined_call_operand.hbm [shape: f32[1,128], index: 5, kind: input, shape index: {}]
  %s6 = inlined_call_operand.hbm [shape: bf16[128,128], index: 6, kind: input, shape index: {}]
  %s7 = inlined_call_operand.hbm [shape: f32[1,128], index: 7, kind: input, shape index: {}]
  %s8 = inlined_call_operand.hbm [shape: bf16[128,1024], index: 8, kind: input, shape index: {}]
  %s9 = inlined_call_operand.vmem [shape: f32[1,1024], index: 9, kind: input, shape index: {}]
  %s10 = inlined_call_operand.hbm [shape: f32[8,1024], index: 10, kind: output, shape index: {0}]
  %s11 = inlined_call_operand.hbm [shape: f32[8,1024], index: 11, kind: output, shape index: {1}]
  %12 = xla_tuple %s10, %s11
  %s13 = sld [smem:[#allocation0]]
  $region94: #{tpu_custom_call.1} parent=0
    _
  %s15 = ssub.s32 1, %s13
  %s16 = scalar_select 0, %s15, %s13
  $region1: #{tpu_custom_call.1} parent=0
    #allocation2 [shape = 'u8[32768]{0}', space=vmem, size = 0x8000, scoped, tag = 'input window, operand 0, single buffered']
    #allocation3 [shape = 's32[1]{0}', space=sflag, size = 0x4, scoped, tag = 'scoped memory for tpu_custom_call.1']
    #allocation4 [shape = 's32[1]{0}', space=sflag, size = 0x4, scoped, tag = 'scoped memory for tpu_custom_call.1']
    #allocation5 [shape = 'u8[32768]{0}', space=vmem, size = 0x8000, scoped, tag = 'input window, operand 1, single buffered']
    #allocation6 [shape = 's32[1]{0}', space=sflag, size = 0x4, scoped, tag = 'scoped memory for tpu_custom_call.1']
    #allocation7 [shape = 'u8[262144]{0}', space=vmem, size = 0x40000, scoped, tag = 'input window, operand 2, single buffered']
    #allocation8 [shape = 'u8[512]{0}', space=vmem, size = 0x400, scoped, tag = 'input window, operand 3, single buffered']
    #allocation9 [shape = 's32[1]{0}', space=sflag, size = 0x4, scoped, tag = 'scoped memory for tpu_custom_call.1']
    #allocation10 [shape = 'u8[32768]{0}', space=vmem, size = 0x8000, scoped, tag = 'input window, operand 4, single buffered']
    #allocation11 [shape = 'u8[512]{0}', space=vmem, size = 0x400, scoped, tag = 'input window, operand 5, single buffered']
    #allocation12 [shape = 's32[1]{0}', space=sflag, size = 0x4, scoped, tag = 'scoped memory for tpu_custom_call.1']
    #allocation13 [shape = 'u8[32768]{0}', space=vmem, size = 0x8000, scoped, tag = 'input window, operand 6, single buffered']
    #allocation14 [shape = 'u8[512]{0}', space=vmem, size = 0x400, scoped, tag = 'input window, operand 7, single buffered']
    #allocation15 [shape = 's32[1]{0}', space=sflag, size = 0x4, scoped, tag = 'scoped memory for tpu_custom_call.1']
    #allocation16 [shape = 'u8[262144]{0}', space=vmem, size = 0x40000, scoped, tag = 'input window, operand 8, single buffered']
    #allocation17 [shape = 'u8[32768]{0}', space=vmem, size = 0x8000, scoped, tag = 'output window, operand 0, single buffered']
    #allocation18 [shape = 'u8[32768]{0}', space=vmem, size = 0x8000, scoped, tag = 'output window, operand 1, single buffered']
    #allocation19 [shape = 's32[1]{0}', space=sflag, size = 0x4, scoped, tag = 'scoped memory for tpu_custom_call.1']
    %17 = vsyncpa [#allocation3], 0
    %18 = vsyncpa [#allocation6], 0
    %19 = vsyncpa [#allocation9], 0
    %20 = vsyncpa [#allocation12], 0
    %21 = vsyncpa [#allocation15], 0
    %22 = vsyncpa [#allocation4], 0
    %23 = vsyncpa [#allocation19], 0
    // Predicated region
    $region2: #{tpu_custom_call.1} parent=1 // pred_check
      _
    $region3: #{tpu_custom_call.1} parent=1 // pred_check_branch
      %25 = sbr.rel (0) target = $region5
    $region4: #{tpu_custom_call.1} parent=1 // pred_region
      %27 = vsyncadd [#allocation3], 0
      %s29 = sshll.u32 %s0, 4
      %s30 = int_to_ptr.hbm [resolvable:$true] %s29
      %s31 = sshll.u32 [#allocation2], 4
      %s32 = int_to_ptr.vmem [resolvable:$true] %s31
      %34 = dma.hbm_to_vmem [thread:$0]  %s30, 1024, %s32, [#allocation3]
    $region5: #{tpu_custom_call.1} parent=1 // pred_fallthru
      _
    // Predicated region
    $region6: #{tpu_custom_call.1} parent=1 // pred_check
      _
    $region7: #{tpu_custom_call.1} parent=1 // pred_check_branch
      %36 = sbr.rel (0) target = $region9
    $region8: #{tpu_custom_call.1} parent=1 // pred_region
      %38 = vsyncadd [#allocation6], 0
      %s40 = sshll.u32 %s1, 4
      %s41 = int_to_ptr.hbm [resolvable:$true] %s40
      %s42 = sshll.u32 [#allocation5], 4
      %s43 = int_to_ptr.vmem [resolvable:$true] %s42
      %45 = dma.hbm_to_vmem [thread:$0]  %s41, 1024, %s43, [#allocation6]
    $region9: #{tpu_custom_call.1} parent=1 // pred_fallthru
      _
    // Predicated region
    $region10: #{tpu_custom_call.1} parent=1 // pred_check
      _
    $region11: #{tpu_custom_call.1} parent=1 // pred_check_branch
      %47 = sbr.rel (0) target = $region13
    $region12: #{tpu_custom_call.1} parent=1 // pred_region
      %49 = vsyncadd [#allocation6], 0
      %s50 = sshll.u32 %s2, 4
      %s51 = int_to_ptr.hbm [resolvable:$true] %s50
      %s52 = sshll.u32 [#allocation7], 4
      %s53 = int_to_ptr.vmem [resolvable:$true] %s52
      %58 = dma.hbm_to_vmem [thread:$0]  %s51, 8192, %s53, [#allocation6], 64, 64, 4
    $region13: #{tpu_custom_call.1} parent=1 // pred_fallthru
      _
    // Predicated region
    $region14: #{tpu_custom_call.1} parent=1 // pred_check
      _
    $region15: #{tpu_custom_call.1} parent=1 // pred_check_branch
      %60 = sbr.rel (0) target = $region17
    $region16: #{tpu_custom_call.1} parent=1 // pred_region
      %62 = vsyncadd [#allocation9], 0
      %s64 = sshll.u32 %s3, 4
      %s65 = int_to_ptr.hbm [resolvable:$true] %s64
      %s66 = sshll.u32 [#allocation8], 4
      %s67 = int_to_ptr.vmem [resolvable:$true] %s66
      %69 = dma.hbm_to_vmem [thread:$0]  %s65, 16, %s67, [#allocation9]
    $region17: #{tpu_custom_call.1} parent=1 // pred_fallthru
      _
    // Predicated region
    $region18: #{tpu_custom_call.1} parent=1 // pred_check
      _
    $region19: #{tpu_custom_call.1} parent=1 // pred_check_branch
      %71 = sbr.rel (0) target = $region21
    $region20: #{tpu_custom_call.1} parent=1 // pred_region
      %73 = vsyncadd [#allocation9], 0
      %s74 = sshll.u32 %s4, 4
      %s75 = int_to_ptr.hbm [resolvable:$true] %s74
      %s76 = sshll.u32 [#allocation10], 4
      %s77 = int_to_ptr.vmem [resolvable:$true] %s76
      %82 = dma.hbm_to_vmem [thread:$0]  %s75, 1024, %s77, [#allocation9], 64, 64, 4
    $region21: #{tpu_custom_call.1} parent=1 // pred_fallthru
      _
    // Predicated region
    $region22: #{tpu_custom_call.1} parent=1 // pred_check
      _
    $region23: #{tpu_custom_call.1} parent=1 // pred_check_branch
      %84 = sbr.rel (0) target = $region25
    $region24: #{tpu_custom_call.1} parent=1 // pred_region
      %86 = vsyncadd [#allocation12], 0
      %s88 = sshll.u32 %s5, 4
      %s89 = int_to_ptr.hbm [resolvable:$true] %s88
      %s90 = sshll.u32 [#allocation11], 4
      %s91 = int_to_ptr.vmem [resolvable:$true] %s90
      %93 = dma.hbm_to_vmem [thread:$0]  %s89, 16, %s91, [#allocation12]
    $region25: #{tpu_custom_call.1} parent=1 // pred_fallthru
      _
    // Predicated region
    $region26: #{tpu_custom_call.1} parent=1 // pred_check
      _
    $region27: #{tpu_custom_call.1} parent=1 // pred_check_branch
      %95 = sbr.rel (0) target = $region29
    $region28: #{tpu_custom_call.1} parent=1 // pred_region
      %97 = vsyncadd [#allocation12], 0
      %s98 = sshll.u32 %s6, 4
      %s99 = int_to_ptr.hbm [resolvable:$true] %s98
      %s100 = sshll.u32 [#allocation13], 4
      %s101 = int_to_ptr.vmem [resolvable:$true] %s100
      %106 = dma.hbm_to_vmem [thread:$0]  %s99, 1024, %s101, [#allocation12], 64, 64, 4
    $region29: #{tpu_custom_call.1} parent=1 // pred_fallthru
      _
    // Predicated region
    $region30: #{tpu_custom_call.1} parent=1 // pred_check
      _
    $region31: #{tpu_custom_call.1} parent=1 // pred_check_branch
      %108 = sbr.rel (0) target = $region33
    $region32: #{tpu_custom_call.1} parent=1 // pred_region
      %110 = vsyncadd [#allocation15], 0
      %s112 = sshll.u32 %s7, 4
      %s113 = int_to_ptr.hbm [resolvable:$true] %s112
      %s114 = sshll.u32 [#allocation14], 4
      %s115 = int_to_ptr.vmem [resolvable:$true] %s114
      %117 = dma.hbm_to_vmem [thread:$0]  %s113, 16, %s115, [#allocation15]
    $region33: #{tpu_custom_call.1} parent=1 // pred_fallthru
      _
    // Predicated region
    $region34: #{tpu_custom_call.1} parent=1 // pred_check
      _
    $region35: #{tpu_custom_call.1} parent=1 // pred_check_branch
      %119 = sbr.rel (0) target = $region37
    $region36: #{tpu_custom_call.1} parent=1 // pred_region
      %121 = vsyncadd [#allocation15], 0
      %s122 = sshll.u32 %s8, 4
      %s123 = int_to_ptr.hbm [resolvable:$true] %s122
      %s124 = sshll.u32 [#allocation16], 4
      %s125 = int_to_ptr.vmem [resolvable:$true] %s124
      %130 = dma.hbm_to_vmem [thread:$0]  %s123, 8192, %s125, [#allocation15], 512, 512, 32
    $region37: #{tpu_custom_call.1} parent=1 // pred_fallthru
      _
    // Predicated region
    $region38: #{tpu_custom_call.1} parent=1 // pred_check
      _
    $region39: #{tpu_custom_call.1} parent=1 // pred_check_branch
      %132 = sbr.rel (0) target = $region41
    $region40: #{tpu_custom_call.1} parent=1 // pred_region
      _
    $region41: #{tpu_custom_call.1} parent=1 // pred_fallthru
      _
    // Predicated region
    $region42: #{tpu_custom_call.1} parent=1 // pred_check
      _
    $region43: #{tpu_custom_call.1} parent=1 // pred_check_branch
      %134 = sbr.rel (0) target = $region45
    $region44: #{tpu_custom_call.1} parent=1 // pred_region
      %136 = dma.done [#allocation3], 1024
    $region45: #{tpu_custom_call.1} parent=1 // pred_fallthru
      _
    // Predicated region
    $region46: #{tpu_custom_call.1} parent=1 // pred_check
      _
    $region47: #{tpu_custom_call.1} parent=1 // pred_check_branch
      %138 = sbr.rel (0) target = $region49
    $region48: #{tpu_custom_call.1} parent=1 // pred_region
      %140 = dma.done [#allocation6], 1024
    $region49: #{tpu_custom_call.1} parent=1 // pred_fallthru
      _
    // Predicated region
    $region50: #{tpu_custom_call.1} parent=1 // pred_check
      _
    $region51: #{tpu_custom_call.1} parent=1 // pred_check_branch
      %142 = sbr.rel (0) target = $region53
    $region52: #{tpu_custom_call.1} parent=1 // pred_region
      %144 = dma.done [#allocation6], 8192
    $region53: #{tpu_custom_call.1} parent=1 // pred_fallthru
      _
    // Predicated region
    $region54: #{tpu_custom_call.1} parent=1 // pred_check
      _
    $region55: #{tpu_custom_call.1} parent=1 // pred_check_branch
      %146 = sbr.rel (0) target = $region57
    $region56: #{tpu_custom_call.1} parent=1 // pred_region
      %148 = dma.done [#allocation9], 16
    $region57: #{tpu_custom_call.1} parent=1 // pred_fallthru
      _
    // Predicated region
    $region58: #{tpu_custom_call.1} parent=1 // pred_check
      _
    $region59: #{tpu_custom_call.1} parent=1 // pred_check_branch
      %150 = sbr.rel (0) target = $region61
    $region60: #{tpu_custom_call.1} parent=1 // pred_region
      %152 = dma.done [#allocation9], 1024
    $region61: #{tpu_custom_call.1} parent=1 // pred_fallthru
      _
    // Predicated region
    $region62: #{tpu_custom_call.1} parent=1 // pred_check
      _
    $region63: #{tpu_custom_call.1} parent=1 // pred_check_branch
      %154 = sbr.rel (0) target = $region65
    $region64: #{tpu_custom_call.1} parent=1 // pred_region
      %156 = dma.done [#allocation12], 16
    $region65: #{tpu_custom_call.1} parent=1 // pred_fallthru
      _
    // Predicated region
    $region66: #{tpu_custom_call.1} parent=1 // pred_check
      _
    $region67: #{tpu_custom_call.1} parent=1 // pred_check_branch
      %158 = sbr.rel (0) target = $region69
    $region68: #{tpu_custom_call.1} parent=1 // pred_region
      %160 = dma.done [#allocation12], 1024
    $region69: #{tpu_custom_call.1} parent=1 // pred_fallthru
      _
    // Predicated region
    $region70: #{tpu_custom_call.1} parent=1 // pred_check
      _
    $region71: #{tpu_custom_call.1} parent=1 // pred_check_branch
      %162 = sbr.rel (0) target = $region73
    $region72: #{tpu_custom_call.1} parent=1 // pred_region
      %164 = dma.done [#allocation15], 16
    $region73: #{tpu_custom_call.1} parent=1 // pred_fallthru
      _
    // Predicated region
    $region74: #{tpu_custom_call.1} parent=1 // pred_check
      _
    $region75: #{tpu_custom_call.1} parent=1 // pred_check_branch
      %166 = sbr.rel (0) target = $region77
    $region76: #{tpu_custom_call.1} parent=1 // pred_region
      %168 = dma.done [#allocation15], 8192
    $region77: #{tpu_custom_call.1} parent=1 // pred_fallthru
      _
    %v169 = vld [vmem:[#allocation2] sm:$0xff]
    %v170 = vld [vmem:[#allocation2 + $0x8] sm:$0xff]
    %v171 = vld [vmem:[#allocation2 + $0x10] sm:$0xff]
    %v172 = vld [vmem:[#allocation2 + $0x18] sm:$0xff]
    %v173 = vld [vmem:[#allocation2 + $0x20] sm:$0xff]
    %v174 = vld [vmem:[#allocation2 + $0x28] sm:$0xff]
    %v175 = vld [vmem:[#allocation2 + $0x30] sm:$0xff]
    %v176 = vld [vmem:[#allocation2 + $0x38] sm:$0xff]
    %v177 = vld [vmem:[#allocation5] sm:$0xff]
    %v178 = vld [vmem:[#allocation5 + $0x8] sm:$0xff]
    %v179 = vld [vmem:[#allocation5 + $0x10] sm:$0xff]
    %v180 = vld [vmem:[#allocation5 + $0x18] sm:$0xff]
    %v181 = vld [vmem:[#allocation5 + $0x20] sm:$0xff]
    %v182 = vld [vmem:[#allocation5 + $0x28] sm:$0xff]
    %v183 = vld [vmem:[#allocation5 + $0x30] sm:$0xff]
    %v184 = vld [vmem:[#allocation5 + $0x38] sm:$0xff]
    %vm185 = vcmp.lt.s32.totalorder %v177, 3355443
    %vm186 = vcmp.lt.s32.totalorder %v178, 3355443
    %vm187 = vcmp.lt.s32.totalorder %v179, 3355443
    %vm188 = vcmp.lt.s32.totalorder %v180, 3355443
    %vm189 = vcmp.lt.s32.totalorder %v181, 3355443
    %vm190 = vcmp.lt.s32.totalorder %v182, 3355443
    %vm191 = vcmp.lt.s32.totalorder %v183, 3355443
    %vm192 = vcmp.lt.s32.totalorder %v184, 3355443
    %v193 = vand.u32 %v177, 1
    %v194 = vand.u32 %v178, 1
    %v195 = vand.u32 %v179, 1
    %v196 = vand.u32 %v180, 1
    %v197 = vand.u32 %v181, 1
    %v198 = vand.u32 %v182, 1
    %v199 = vand.u32 %v183, 1
    %v200 = vand.u32 %v184, 1
    %v201 = vcvt.s32.f32 %v193
    %v202 = vcvt.s32.f32 %v194
    %v203 = vcvt.s32.f32 %v195
    %v204 = vcvt.s32.f32 %v196
    %v205 = vcvt.s32.f32 %v197
    %v206 = vcvt.s32.f32 %v198
    %v207 = vcvt.s32.f32 %v199
    %v208 = vcvt.s32.f32 %v200
    %v209 = vsel %vm185, %v201, %v169
    %v210 = vsel %vm186, %v202, %v170
    %v211 = vsel %vm187, %v203, %v171
    %v212 = vsel %vm188, %v204, %v172
    %v213 = vsel %vm189, %v205, %v173
    %v214 = vsel %vm190, %v206, %v174
    %v215 = vsel %vm191, %v207, %v175
    %v216 = vsel %vm192, %v208, %v176
    %217 = vst [vmem:[#allocation18] sm:$0xff] %v209
    %218 = vst [vmem:[#allocation18 + $0x8] sm:$0xff] %v210
    %219 = vst [vmem:[#allocation18 + $0x10] sm:$0xff] %v211
    %220 = vst [vmem:[#allocation18 + $0x18] sm:$0xff] %v212
    %221 = vst [vmem:[#allocation18 + $0x20] sm:$0xff] %v213
    %222 = vst [vmem:[#allocation18 + $0x28] sm:$0xff] %v214
    %223 = vst [vmem:[#allocation18 + $0x30] sm:$0xff] %v215
    %224 = vst [vmem:[#allocation18 + $0x38] sm:$0xff] %v216
    %v225 = vpack.c.bf16 %v209, %v209
    %v226 = vpack.c.bf16 %v210, %v210
    %v227 = vpack.c.bf16 %v211, %v211
    %v228 = vpack.c.bf16 %v212, %v212
    %v229 = vpack.c.bf16 %v213, %v213
    %v230 = vpack.c.bf16 %v214, %v214
    %v231 = vpack.c.bf16 %v215, %v215
    %v232 = vpack.c.bf16 %v216, %v216
    %v233 = vld [vmem:[#allocation7] sm:$0xf]
    %v234 = vld [vmem:[#allocation7 + $0x4] sm:$0xf]
    %v235 = vld [vmem:[#allocation7 + $0x8] sm:$0xf]
    %v236 = vld [vmem:[#allocation7 + $0xc] sm:$0xf]
    %v237 = vld [vmem:[#allocation7 + $0x10] sm:$0xf]
    %v238 = vld [vmem:[#allocation7 + $0x14] sm:$0xf]
    %v239 = vld [vmem:[#allocation7 + $0x18] sm:$0xf]
    %v240 = vld [vmem:[#allocation7 + $0x1c] sm:$0xf]
    %v241 = vld [vmem:[#allocation7 + $0x20] sm:$0xf]
    %v242 = vld [vmem:[#allocation7 + $0x24] sm:$0xf]
    %v243 = vld [vmem:[#allocation7 + $0x28] sm:$0xf]
    %v244 = vld [vmem:[#allocation7 + $0x2c] sm:$0xf]
    %v245 = vld [vmem:[#allocation7 + $0x30] sm:$0xf]
    %v246 = vld [vmem:[#allocation7 + $0x34] sm:$0xf]
    %v247 = vld [vmem:[#allocation7 + $0x38] sm:$0xf]
    %v248 = vld [vmem:[#allocation7 + $0x3c] sm:$0xf]
    %v249 = vld [vmem:[#allocation7 + $0x40] sm:$0xf]
    %v250 = vld [vmem:[#allocation7 + $0x44] sm:$0xf]
    %v251 = vld [vmem:[#allocation7 + $0x48] sm:$0xf]
    %v252 = vld [vmem:[#allocation7 + $0x4c] sm:$0xf]
    %v253 = vld [vmem:[#allocation7 + $0x50] sm:$0xf]
    %v254 = vld [vmem:[#allocation7 + $0x54] sm:$0xf]
    %v255 = vld [vmem:[#allocation7 + $0x58] sm:$0xf]
    %v256 = vld [vmem:[#allocation7 + $0x5c] sm:$0xf]
    %v257 = vld [vmem:[#allocation7 + $0x60] sm:$0xf]
    %v258 = vld [vmem:[#allocation7 + $0x64] sm:$0xf]
    %v259 = vld [vmem:[#allocation7 + $0x68] sm:$0xf]
    %v260 = vld [vmem:[#allocation7 + $0x6c] sm:$0xf]
    %v261 = vld [vmem:[#allocation7 + $0x70] sm:$0xf]
    %v262 = vld [vmem:[#allocation7 + $0x74] sm:$0xf]
    %v263 = vld [vmem:[#allocation7 + $0x78] sm:$0xf]
    %v264 = vld [vmem:[#allocation7 + $0x7c] sm:$0xf]
    %v265 = vld [vmem:[#allocation7 + $0x80] sm:$0xf]
    %v266 = vld [vmem:[#allocation7 + $0x84] sm:$0xf]
    %v267 = vld [vmem:[#allocation7 + $0x88] sm:$0xf]
    %v268 = vld [vmem:[#allocation7 + $0x8c] sm:$0xf]
    %v269 = vld [vmem:[#allocation7 + $0x90] sm:$0xf]
    %v270 = vld [vmem:[#allocation7 + $0x94] sm:$0xf]
    %v271 = vld [vmem:[#allocation7 + $0x98] sm:$0xf]
    %v272 = vld [vmem:[#allocation7 + $0x9c] sm:$0xf]
    %v273 = vld [vmem:[#allocation7 + $0xa0] sm:$0xf]
    %v274 = vld [vmem:[#allocation7 + $0xa4] sm:$0xf]
    %v275 = vld [vmem:[#allocation7 + $0xa8] sm:$0xf]
    %v276 = vld [vmem:[#allocation7 + $0xac] sm:$0xf]
    %v277 = vld [vmem:[#allocation7 + $0xb0] sm:$0xf]
    %v278 = vld [vmem:[#allocation7 + $0xb4] sm:$0xf]
    %v279 = vld [vmem:[#allocation7 + $0xb8] sm:$0xf]
    %v280 = vld [vmem:[#allocation7 + $0xbc] sm:$0xf]
    %v281 = vld [vmem:[#allocation7 + $0xc0] sm:$0xf]
    %v282 = vld [vmem:[#allocation7 + $0xc4] sm:$0xf]
    %v283 = vld [vmem:[#allocation7 + $0xc8] sm:$0xf]
    %v284 = vld [vmem:[#allocation7 + $0xcc] sm:$0xf]
    %v285 = vld [vmem:[#allocation7 + $0xd0] sm:$0xf]
    %v286 = vld [vmem:[#allocation7 + $0xd4] sm:$0xf]
    %v287 = vld [vmem:[#allocation7 + $0xd8] sm:$0xf]
    %v288 = vld [vmem:[#allocation7 + $0xdc] sm:$0xf]
    %v289 = vld [vmem:[#allocation7 + $0xe0] sm:$0xf]
    %v290 = vld [vmem:[#allocation7 + $0xe4] sm:$0xf]
    %v291 = vld [vmem:[#allocation7 + $0xe8] sm:$0xf]
    %v292 = vld [vmem:[#allocation7 + $0xec] sm:$0xf]
    %v293 = vld [vmem:[#allocation7 + $0xf0] sm:$0xf]
    %v294 = vld [vmem:[#allocation7 + $0xf4] sm:$0xf]
    %v295 = vld [vmem:[#allocation7 + $0xf8] sm:$0xf]
    %v296 = vld [vmem:[#allocation7 + $0xfc] sm:$0xf]
    %v297 = vld [vmem:[#allocation7 + $0x100] sm:$0xf]
    %v298 = vld [vmem:[#allocation7 + $0x104] sm:$0xf]
    %v299 = vld [vmem:[#allocation7 + $0x108] sm:$0xf]
    %v300 = vld [vmem:[#allocation7 + $0x10c] sm:$0xf]
    %v301 = vld [vmem:[#allocation7 + $0x110] sm:$0xf]
    %v302 = vld [vmem:[#allocation7 + $0x114] sm:$0xf]
    %v303 = vld [vmem:[#allocation7 + $0x118] sm:$0xf]
    %v304 = vld [vmem:[#allocation7 + $0x11c] sm:$0xf]
    %v305 = vld [vmem:[#allocation7 + $0x120] sm:$0xf]
    %v306 = vld [vmem:[#allocation7 + $0x124] sm:$0xf]
    %v307 = vld [vmem:[#allocation7 + $0x128] sm:$0xf]
    %v308 = vld [vmem:[#allocation7 + $0x12c] sm:$0xf]
    %v309 = vld [vmem:[#allocation7 + $0x130] sm:$0xf]
    %v310 = vld [vmem:[#allocation7 + $0x134] sm:$0xf]
    %v311 = vld [vmem:[#allocation7 + $0x138] sm:$0xf]
    %v312 = vld [vmem:[#allocation7 + $0x13c] sm:$0xf]
    %v313 = vld [vmem:[#allocation7 + $0x140] sm:$0xf]
    %v314 = vld [vmem:[#allocation7 + $0x144] sm:$0xf]
    %v315 = vld [vmem:[#allocation7 + $0x148] sm:$0xf]
    %v316 = vld [vmem:[#allocation7 + $0x14c] sm:$0xf]
    %v317 = vld [vmem:[#allocation7 + $0x150] sm:$0xf]
    %v318 = vld [vmem:[#allocation7 + $0x154] sm:$0xf]
    %v319 = vld [vmem:[#allocation7 + $0x158] sm:$0xf]
    %v320 = vld [vmem:[#allocation7 + $0x15c] sm:$0xf]
    %v321 = vld [vmem:[#allocation7 + $0x160] sm:$0xf]
    %v322 = vld [vmem:[#allocation7 + $0x164] sm:$0xf]
    %v323 = vld [vmem:[#allocation7 + $0x168] sm:$0xf]
    %v324 = vld [vmem:[#allocation7 + $0x16c] sm:$0xf]
    %v325 = vld [vmem:[#allocation7 + $0x170] sm:$0xf]
    %v326 = vld [vmem:[#allocation7 + $0x174] sm:$0xf]
    %v327 = vld [vmem:[#allocation7 + $0x178] sm:$0xf]
    %v328 = vld [vmem:[#allocation7 + $0x17c] sm:$0xf]
    %v329 = vld [vmem:[#allocation7 + $0x180] sm:$0xf]
    %v330 = vld [vmem:[#allocation7 + $0x184] sm:$0xf]
    %v331 = vld [vmem:[#allocation7 + $0x188] sm:$0xf]
    %v332 = vld [vmem:[#allocation7 + $0x18c] sm:$0xf]
    %v333 = vld [vmem:[#allocation7 + $0x190] sm:$0xf]
    %v334 = vld [vmem:[#allocation7 + $0x194] sm:$0xf]
    %v335 = vld [vmem:[#allocation7 + $0x198] sm:$0xf]
    %v336 = vld [vmem:[#allocation7 + $0x19c] sm:$0xf]
    %v337 = vld [vmem:[#allocation7 + $0x1a0] sm:$0xf]
    %v338 = vld [vmem:[#allocation7 + $0x1a4] sm:$0xf]
    %v339 = vld [vmem:[#allocation7 + $0x1a8] sm:$0xf]
    %v340 = vld [vmem:[#allocation7 + $0x1ac] sm:$0xf]
    %v341 = vld [vmem:[#allocation7 + $0x1b0] sm:$0xf]
    %v342 = vld [vmem:[#allocation7 + $0x1b4] sm:$0xf]
    %v343 = vld [vmem:[#allocation7 + $0x1b8] sm:$0xf]
    %v344 = vld [vmem:[#allocation7 + $0x1bc] sm:$0xf]
    %v345 = vld [vmem:[#allocation7 + $0x1c0] sm:$0xf]
    %v346 = vld [vmem:[#allocation7 + $0x1c4] sm:$0xf]
    %v347 = vld [vmem:[#allocation7 + $0x1c8] sm:$0xf]
    %v348 = vld [vmem:[#allocation7 + $0x1cc] sm:$0xf]
    %v349 = vld [vmem:[#allocation7 + $0x1d0] sm:$0xf]
    %v350 = vld [vmem:[#allocation7 + $0x1d4] sm:$0xf]
    %v351 = vld [vmem:[#allocation7 + $0x1d8] sm:$0xf]
    %v352 = vld [vmem:[#allocation7 + $0x1dc] sm:$0xf]
    %v353 = vld [vmem:[#allocation7 + $0x1e0] sm:$0xf]
    %v354 = vld [vmem:[#allocation7 + $0x1e4] sm:$0xf]
    %v355 = vld [vmem:[#allocation7 + $0x1e8] sm:$0xf]
    %v356 = vld [vmem:[#allocation7 + $0x1ec] sm:$0xf]
    %v357 = vld [vmem:[#allocation7 + $0x1f0] sm:$0xf]
    %v358 = vld [vmem:[#allocation7 + $0x1f4] sm:$0xf]
    %v359 = vld [vmem:[#allocation7 + $0x1f8] sm:$0xf]
    %v360 = vld [vmem:[#allocation7 + $0x1fc] sm:$0xf]
    %v361 = vld [vmem:[#allocation8] sm:$0x1]
    %v363 = vperm.slane %v361, 0
    %v493 = vunpack.c.l.b16 %v233
    %v494 = vunpack.c.l.b16 %v234
    %v495 = vunpack.c.l.b16 %v235
    %v496 = vunpack.c.l.b16 %v236
    %v497 = vunpack.c.l.b16 %v237
    %v498 = vunpack.c.l.b16 %v238
    %v499 = vunpack.c.l.b16 %v239
    %v500 = vunpack.c.l.b16 %v240
    %v501 = vunpack.c.l.b16 %v241
    %v502 = vunpack.c.l.b16 %v242
    %v503 = vunpack.c.l.b16 %v243
    %v504 = vunpack.c.l.b16 %v244
    %v505 = vunpack.c.l.b16 %v245
    %v506 = vunpack.c.l.b16 %v246
    %v507 = vunpack.c.l.b16 %v247
    %v508 = vunpack.c.l.b16 %v248
    %v509 = vunpack.c.l.b16 %v249
    %v510 = vunpack.c.l.b16 %v250
    %v511 = vunpack.c.l.b16 %v251
    %v512 = vunpack.c.l.b16 %v252
    %v513 = vunpack.c.l.b16 %v253
    %v514 = vunpack.c.l.b16 %v254
    %v515 = vunpack.c.l.b16 %v255
    %v516 = vunpack.c.l.b16 %v256
    %v517 = vunpack.c.l.b16 %v257
    %v518 = vunpack.c.l.b16 %v258
    %v519 = vunpack.c.l.b16 %v259
    %v520 = vunpack.c.l.b16 %v260
    %v521 = vunpack.c.l.b16 %v261
    %v522 = vunpack.c.l.b16 %v262
    %v523 = vunpack.c.l.b16 %v263
    %v524 = vunpack.c.l.b16 %v264
    %v525 = vunpack.c.l.b16 %v265
    %v526 = vunpack.c.l.b16 %v266
    %v527 = vunpack.c.l.b16 %v267
    %v528 = vunpack.c.l.b16 %v268
    %v529 = vunpack.c.l.b16 %v269
    %v530 = vunpack.c.l.b16 %v270
    %v531 = vunpack.c.l.b16 %v271
    %v532 = vunpack.c.l.b16 %v272
    %v533 = vunpack.c.l.b16 %v273
    %v534 = vunpack.c.l.b16 %v274
    %v535 = vunpack.c.l.b16 %v275
    %v536 = vunpack.c.l.b16 %v276
    %v537 = vunpack.c.l.b16 %v277
    %v538 = vunpack.c.l.b16 %v278
    %v539 = vunpack.c.l.b16 %v279
    %v540 = vunpack.c.l.b16 %v280
    %v541 = vunpack.c.l.b16 %v281
    %v542 = vunpack.c.l.b16 %v282
    %v543 = vunpack.c.l.b16 %v283
    %v544 = vunpack.c.l.b16 %v284
    %v545 = vunpack.c.l.b16 %v285
    %v546 = vunpack.c.l.b16 %v286
    %v547 = vunpack.c.l.b16 %v287
    %v548 = vunpack.c.l.b16 %v288
    %v549 = vunpack.c.l.b16 %v289
    %v550 = vunpack.c.l.b16 %v290
    %v551 = vunpack.c.l.b16 %v291
    %v552 = vunpack.c.l.b16 %v292
    %v553 = vunpack.c.l.b16 %v293
    %v554 = vunpack.c.l.b16 %v294
    %v555 = vunpack.c.l.b16 %v295
    %v556 = vunpack.c.l.b16 %v296
    %v557 = vunpack.c.l.b16 %v297
    %v558 = vunpack.c.l.b16 %v298
    %v559 = vunpack.c.l.b16 %v299
    %v560 = vunpack.c.l.b16 %v300
    %v561 = vunpack.c.l.b16 %v301
    %v562 = vunpack.c.l.b16 %v302
    %v563 = vunpack.c.l.b16 %v303
    %v564 = vunpack.c.l.b16 %v304
    %v565 = vunpack.c.l.b16 %v305
    %v566 = vunpack.c.l.b16 %v306
    %v567 = vunpack.c.l.b16 %v307
    %v568 = vunpack.c.l.b16 %v308
    %v569 = vunpack.c.l.b16 %v309
    %v570 = vunpack.c.l.b16 %v310
    %v571 = vunpack.c.l.b16 %v311
    %v572 = vunpack.c.l.b16 %v312
    %v573 = vunpack.c.l.b16 %v313
    %v574 = vunpack.c.l.b16 %v314
    %v575 = vunpack.c.l.b16 %v315
    %v576 = vunpack.c.l.b16 %v316
    %v577 = vunpack.c.l.b16 %v317
    %v578 = vunpack.c.l.b16 %v318
    %v579 = vunpack.c.l.b16 %v319
    %v580 = vunpack.c.l.b16 %v320
    %v581 = vunpack.c.l.b16 %v321
    %v582 = vunpack.c.l.b16 %v322
    %v583 = vunpack.c.l.b16 %v323
    %v584 = vunpack.c.l.b16 %v324
    %v585 = vunpack.c.l.b16 %v325
    %v586 = vunpack.c.l.b16 %v326
    %v587 = vunpack.c.l.b16 %v327
    %v588 = vunpack.c.l.b16 %v328
    %v589 = vunpack.c.l.b16 %v329
    %v590 = vunpack.c.l.b16 %v330
    %v591 = vunpack.c.l.b16 %v331
    %v592 = vunpack.c.l.b16 %v332
    %v593 = vunpack.c.l.b16 %v333
    %v594 = vunpack.c.l.b16 %v334
    %v595 = vunpack.c.l.b16 %v335
    %v596 = vunpack.c.l.b16 %v336
    %v597 = vunpack.c.l.b16 %v337
    %v598 = vunpack.c.l.b16 %v338
    %v599 = vunpack.c.l.b16 %v339
    %v600 = vunpack.c.l.b16 %v340
    %v601 = vunpack.c.l.b16 %v341
    %v602 = vunpack.c.l.b16 %v342
    %v603 = vunpack.c.l.b16 %v343
    %v604 = vunpack.c.l.b16 %v344
    %v605 = vunpack.c.l.b16 %v345
    %v606 = vunpack.c.l.b16 %v346
    %v607 = vunpack.c.l.b16 %v347
    %v608 = vunpack.c.l.b16 %v348
    %v609 = vunpack.c.l.b16 %v349
    %v610 = vunpack.c.l.b16 %v350
    %v611 = vunpack.c.l.b16 %v351
    %v612 = vunpack.c.l.b16 %v352
    %v613 = vunpack.c.l.b16 %v353
    %v614 = vunpack.c.l.b16 %v354
    %v615 = vunpack.c.l.b16 %v355
    %v616 = vunpack.c.l.b16 %v356
    %v617 = vunpack.c.l.b16 %v357
    %v618 = vunpack.c.l.b16 %v358
    %v619 = vunpack.c.l.b16 %v359
    %v620 = vunpack.c.l.b16 %v360
    %v621 = vpack.c.b16 %v494, %v493
    %v622 = vpack.c.b16 %v496, %v495
    %v623 = vpack.c.b16 %v498, %v497
    %v624 = vpack.c.b16 %v500, %v499
    %v625 = vpack.c.b16 %v502, %v501
    %v626 = vpack.c.b16 %v504, %v503
    %v627 = vpack.c.b16 %v506, %v505
    %v628 = vpack.c.b16 %v508, %v507
    %v629 = vpack.c.b16 %v510, %v509
    %v630 = vpack.c.b16 %v512, %v511
    %v631 = vpack.c.b16 %v514, %v513
    %v632 = vpack.c.b16 %v516, %v515
    %v633 = vpack.c.b16 %v518, %v517
    %v634 = vpack.c.b16 %v520, %v519
    %v635 = vpack.c.b16 %v522, %v521
    %v636 = vpack.c.b16 %v524, %v523
    %v637 = vpack.c.b16 %v526, %v525
    %v638 = vpack.c.b16 %v528, %v527
    %v639 = vpack.c.b16 %v530, %v529
    %v640 = vpack.c.b16 %v532, %v531
    %v641 = vpack.c.b16 %v534, %v533
    %v642 = vpack.c.b16 %v536, %v535
    %v643 = vpack.c.b16 %v538, %v537
    %v644 = vpack.c.b16 %v540, %v539
    %v645 = vpack.c.b16 %v542, %v541
    %v646 = vpack.c.b16 %v544, %v543
    %v647 = vpack.c.b16 %v546, %v545
    %v648 = vpack.c.b16 %v548, %v547
    %v649 = vpack.c.b16 %v550, %v549
    %v650 = vpack.c.b16 %v552, %v551
    %v651 = vpack.c.b16 %v554, %v553
    %v652 = vpack.c.b16 %v556, %v555
    %v653 = vpack.c.b16 %v558, %v557
    %v654 = vpack.c.b16 %v560, %v559
    %v655 = vpack.c.b16 %v562, %v561
    %v656 = vpack.c.b16 %v564, %v563
    %v657 = vpack.c.b16 %v566, %v565
    %v658 = vpack.c.b16 %v568, %v567
    %v659 = vpack.c.b16 %v570, %v569
    %v660 = vpack.c.b16 %v572, %v571
    %v661 = vpack.c.b16 %v574, %v573
    %v662 = vpack.c.b16 %v576, %v575
    %v663 = vpack.c.b16 %v578, %v577
    %v664 = vpack.c.b16 %v580, %v579
    %v665 = vpack.c.b16 %v582, %v581
    %v666 = vpack.c.b16 %v584, %v583
    %v667 = vpack.c.b16 %v586, %v585
    %v668 = vpack.c.b16 %v588, %v587
    %v669 = vpack.c.b16 %v590, %v589
    %v670 = vpack.c.b16 %v592, %v591
    %v671 = vpack.c.b16 %v594, %v593
    %v672 = vpack.c.b16 %v596, %v595
    %v673 = vpack.c.b16 %v598, %v597
    %v674 = vpack.c.b16 %v600, %v599
    %v675 = vpack.c.b16 %v602, %v601
    %v676 = vpack.c.b16 %v604, %v603
    %v677 = vpack.c.b16 %v606, %v605
    %v678 = vpack.c.b16 %v608, %v607
    %v679 = vpack.c.b16 %v610, %v609
    %v680 = vpack.c.b16 %v612, %v611
    %v681 = vpack.c.b16 %v614, %v613
    %v682 = vpack.c.b16 %v616, %v615
    %v683 = vpack.c.b16 %v618, %v617
    %v684 = vpack.c.b16 %v620, %v619
    %749 = vmatpush.bf16.msra.mxu0 %v628
    %750 = vmatpush.bf16.msra.mxu0 %v627
    %751 = vmatpush.bf16.msra.mxu0 %v626
    %752 = vmatpush.bf16.msra.mxu0 %v625
    %753 = vmatpush.bf16.msra.mxu0 %v624
    %754 = vmatpush.bf16.msra.mxu0 %v623
    %755 = vmatpush.bf16.msra.mxu0 %v622
    %756 = vmatpush.bf16.msra.mxu0 %v621
    %757 = vmatmul.bf16.gmra.mxu0 %v225
    %v758 = vpop.f32.mrf.mxu0
    %v759 = vadd.f32 %v363, %v758
    %v760 = vpop.f32.mrf.mxu0
    %761 = vdwg.mxu0
    %762 = vmatpush.bf16.msra.mxu0 %v636
    %763 = vmatpush.bf16.msra.mxu0 %v635
    %764 = vmatpush.bf16.msra.mxu0 %v634
    %765 = vmatpush.bf16.msra.mxu0 %v633
    %766 = vmatpush.bf16.msra.mxu0 %v632
    %767 = vmatpush.bf16.msra.mxu0 %v631
    %768 = vmatpush.bf16.msra.mxu0 %v630
    %769 = vmatpush.bf16.msra.mxu0 %v629
    %770 = vmatmul.bf16.gmra.mxu0 %v226
    %v771 = vpop.f32.mrf.mxu0
    %v772 = vadd.f32 %v759, %v771
    %v773 = vpop.f32.mrf.mxu0
    %774 = vdwg.mxu0
    %775 = vmatpush.bf16.msra.mxu0 %v644
    %776 = vmatpush.bf16.msra.mxu0 %v643
    %777 = vmatpush.bf16.msra.mxu0 %v642
    %778 = vmatpush.bf16.msra.mxu0 %v641
    %779 = vmatpush.bf16.msra.mxu0 %v640
    %780 = vmatpush.bf16.msra.mxu0 %v639
    %781 = vmatpush.bf16.msra.mxu0 %v638
    %782 = vmatpush.bf16.msra.mxu0 %v637
    %783 = vmatmul.bf16.gmra.mxu0 %v227
    %v784 = vpop.f32.mrf.mxu0
    %v785 = vadd.f32 %v772, %v784
    %v786 = vpop.f32.mrf.mxu0
    %787 = vdwg.mxu0
    %788 = vmatpush.bf16.msra.mxu0 %v652
    %789 = vmatpush.bf16.msra.mxu0 %v651
    %790 = vmatpush.bf16.msra.mxu0 %v650
    %791 = vmatpush.bf16.msra.mxu0 %v649
    %792 = vmatpush.bf16.msra.mxu0 %v648
    %793 = vmatpush.bf16.msra.mxu0 %v647
    %794 = vmatpush.bf16.msra.mxu0 %v646
    %795 = vmatpush.bf16.msra.mxu0 %v645
    %796 = vmatmul.bf16.gmra.mxu0 %v228
    %v797 = vpop.f32.mrf.mxu0
    %v798 = vadd.f32 %v785, %v797
    %v799 = vpop.f32.mrf.mxu0
    %800 = vdwg.mxu0
    %801 = vmatpush.bf16.msra.mxu0 %v660
    %802 = vmatpush.bf16.msra.mxu0 %v659
    %803 = vmatpush.bf16.msra.mxu0 %v658
    %804 = vmatpush.bf16.msra.mxu0 %v657
    %805 = vmatpush.bf16.msra.mxu0 %v656
    %806 = vmatpush.bf16.msra.mxu0 %v655
    %807 = vmatpush.bf16.msra.mxu0 %v654
    %808 = vmatpush.bf16.msra.mxu0 %v653
    %809 = vmatmul.bf16.gmra.mxu0 %v229
    %v810 = vpop.f32.mrf.mxu0
    %v811 = vadd.f32 %v798, %v810
    %v812 = vpop.f32.mrf.mxu0
    %813 = vdwg.mxu0
    %814 = vmatpush.bf16.msra.mxu0 %v668
    %815 = vmatpush.bf16.msra.mxu0 %v667
    %816 = vmatpush.bf16.msra.mxu0 %v666
    %817 = vmatpush.bf16.msra.mxu0 %v665
    %818 = vmatpush.bf16.msra.mxu0 %v664
    %819 = vmatpush.bf16.msra.mxu0 %v663
    %820 = vmatpush.bf16.msra.mxu0 %v662
    %821 = vmatpush.bf16.msra.mxu0 %v661
    %822 = vmatmul.bf16.gmra.mxu0 %v230
    %v823 = vpop.f32.mrf.mxu0
    %v824 = vadd.f32 %v811, %v823
    %v825 = vpop.f32.mrf.mxu0
    %826 = vdwg.mxu0
    %827 = vmatpush.bf16.msra.mxu0 %v676
    %828 = vmatpush.bf16.msra.mxu0 %v675
    %829 = vmatpush.bf16.msra.mxu0 %v674
    %830 = vmatpush.bf16.msra.mxu0 %v673
    %831 = vmatpush.bf16.msra.mxu0 %v672
    %832 = vmatpush.bf16.msra.mxu0 %v671
    %833 = vmatpush.bf16.msra.mxu0 %v670
    %834 = vmatpush.bf16.msra.mxu0 %v669
    %835 = vmatmul.bf16.gmra.mxu0 %v231
    %v836 = vpop.f32.mrf.mxu0
    %v837 = vadd.f32 %v824, %v836
    %v838 = vpop.f32.mrf.mxu0
    %839 = vdwg.mxu0
    %840 = vmatpush.bf16.msra.mxu0 %v684
    %841 = vmatpush.bf16.msra.mxu0 %v683
    %842 = vmatpush.bf16.msra.mxu0 %v682
    %843 = vmatpush.bf16.msra.mxu0 %v681
    %844 = vmatpush.bf16.msra.mxu0 %v680
    %845 = vmatpush.bf16.msra.mxu0 %v679
    %846 = vmatpush.bf16.msra.mxu0 %v678
    %847 = vmatpush.bf16.msra.mxu0 %v677
    %848 = vmatmul.bf16.gmra.mxu0 %v232
    %v849 = vpop.f32.mrf.mxu0
    %v850 = vadd.f32 %v837, %v849
    %v851 = vpop.f32.mrf.mxu0
    %852 = vdwg.mxu0
    %v853 = vmax.f32 %v850, 0.0
    %v854 = vpack.c.bf16 %v853, %v853
    %v855 = vld [vmem:[#allocation10] sm:$0xf]
    %v856 = vld [vmem:[#allocation10 + $0x4] sm:$0xf]
    %v857 = vld [vmem:[#allocation10 + $0x8] sm:$0xf]
    %v858 = vld [vmem:[#allocation10 + $0xc] sm:$0xf]
    %v859 = vld [vmem:[#allocation10 + $0x10] sm:$0xf]
    %v860 = vld [vmem:[#allocation10 + $0x14] sm:$0xf]
    %v861 = vld [vmem:[#allocation10 + $0x18] sm:$0xf]
    %v862 = vld [vmem:[#allocation10 + $0x1c] sm:$0xf]
    %v863 = vld [vmem:[#allocation10 + $0x20] sm:$0xf]
    %v864 = vld [vmem:[#allocation10 + $0x24] sm:$0xf]
    %v865 = vld [vmem:[#allocation10 + $0x28] sm:$0xf]
    %v866 = vld [vmem:[#allocation10 + $0x2c] sm:$0xf]
    %v867 = vld [vmem:[#allocation10 + $0x30] sm:$0xf]
    %v868 = vld [vmem:[#allocation10 + $0x34] sm:$0xf]
    %v869 = vld [vmem:[#allocation10 + $0x38] sm:$0xf]
    %v870 = vld [vmem:[#allocation10 + $0x3c] sm:$0xf]
    %v871 = vld [vmem:[#allocation11] sm:$0x1]
    %v873 = vperm.slane %v871, 0
    %v891 = vunpack.c.l.b16 %v855
    %v892 = vunpack.c.l.b16 %v856
    %v893 = vunpack.c.l.b16 %v857
    %v894 = vunpack.c.l.b16 %v858
    %v895 = vunpack.c.l.b16 %v859
    %v896 = vunpack.c.l.b16 %v860
    %v897 = vunpack.c.l.b16 %v861
    %v898 = vunpack.c.l.b16 %v862
    %v899 = vunpack.c.l.b16 %v863
    %v900 = vunpack.c.l.b16 %v864
    %v901 = vunpack.c.l.b16 %v865
    %v902 = vunpack.c.l.b16 %v866
    %v903 = vunpack.c.l.b16 %v867
    %v904 = vunpack.c.l.b16 %v868
    %v905 = vunpack.c.l.b16 %v869
    %v906 = vunpack.c.l.b16 %v870
    %v907 = vpack.c.b16 %v892, %v891
    %v908 = vpack.c.b16 %v894, %v893
    %v909 = vpack.c.b16 %v896, %v895
    %v910 = vpack.c.b16 %v898, %v897
    %v911 = vpack.c.b16 %v900, %v899
    %v912 = vpack.c.b16 %v902, %v901
    %v913 = vpack.c.b16 %v904, %v903
    %v914 = vpack.c.b16 %v906, %v905
    %923 = vmatpush.bf16.msra.mxu0 %v914
    %924 = vmatpush.bf16.msra.mxu0 %v913
    %925 = vmatpush.bf16.msra.mxu0 %v912
    %926 = vmatpush.bf16.msra.mxu0 %v911
    %927 = vmatpush.bf16.msra.mxu0 %v910
    %928 = vmatpush.bf16.msra.mxu0 %v909
    %929 = vmatpush.bf16.msra.mxu0 %v908
    %930 = vmatpush.bf16.msra.mxu0 %v907
    %931 = vmatmul.bf16.gmra.mxu0 %v854
    %v932 = vpop.f32.mrf.mxu0
    %v933 = vadd.f32 %v873, %v932
    %v934 = vpop.f32.mrf.mxu0
    %935 = vdwg.mxu0
    %v936 = vmax.f32 %v933, 0.0
    %v937 = vpack.c.bf16 %v936, %v936
    %v938 = vld [vmem:[#allocation13] sm:$0xf]
    %v939 = vld [vmem:[#allocation13 + $0x4] sm:$0xf]
    %v940 = vld [vmem:[#allocation13 + $0x8] sm:$0xf]
    %v941 = vld [vmem:[#allocation13 + $0xc] sm:$0xf]
    %v942 = vld [vmem:[#allocation13 + $0x10] sm:$0xf]
    %v943 = vld [vmem:[#allocation13 + $0x14] sm:$0xf]
    %v944 = vld [vmem:[#allocation13 + $0x18] sm:$0xf]
    %v945 = vld [vmem:[#allocation13 + $0x1c] sm:$0xf]
    %v946 = vld [vmem:[#allocation13 + $0x20] sm:$0xf]
    %v947 = vld [vmem:[#allocation13 + $0x24] sm:$0xf]
    %v948 = vld [vmem:[#allocation13 + $0x28] sm:$0xf]
    %v949 = vld [vmem:[#allocation13 + $0x2c] sm:$0xf]
    %v950 = vld [vmem:[#allocation13 + $0x30] sm:$0xf]
    %v951 = vld [vmem:[#allocation13 + $0x34] sm:$0xf]
    %v952 = vld [vmem:[#allocation13 + $0x38] sm:$0xf]
    %v953 = vld [vmem:[#allocation13 + $0x3c] sm:$0xf]
    %v954 = vld [vmem:[#allocation14] sm:$0x1]
    %v956 = vperm.slane %v954, 0
    %v974 = vunpack.c.l.b16 %v938
    %v975 = vunpack.c.l.b16 %v939
    %v976 = vunpack.c.l.b16 %v940
    %v977 = vunpack.c.l.b16 %v941
    %v978 = vunpack.c.l.b16 %v942
    %v979 = vunpack.c.l.b16 %v943
    %v980 = vunpack.c.l.b16 %v944
    %v981 = vunpack.c.l.b16 %v945
    %v982 = vunpack.c.l.b16 %v946
    %v983 = vunpack.c.l.b16 %v947
    %v984 = vunpack.c.l.b16 %v948
    %v985 = vunpack.c.l.b16 %v949
    %v986 = vunpack.c.l.b16 %v950
    %v987 = vunpack.c.l.b16 %v951
    %v988 = vunpack.c.l.b16 %v952
    %v989 = vunpack.c.l.b16 %v953
    %v990 = vpack.c.b16 %v975, %v974
    %v991 = vpack.c.b16 %v977, %v976
    %v992 = vpack.c.b16 %v979, %v978
    %v993 = vpack.c.b16 %v981, %v980
    %v994 = vpack.c.b16 %v983, %v982
    %v995 = vpack.c.b16 %v985, %v984
    %v996 = vpack.c.b16 %v987, %v986
    %v997 = vpack.c.b16 %v989, %v988
    %1006 = vmatpush.bf16.msra.mxu0 %v997
    %1007 = vmatpush.bf16.msra.mxu0 %v996
    %1008 = vmatpush.bf16.msra.mxu0 %v995
    %1009 = vmatpush.bf16.msra.mxu0 %v994
    %1010 = vmatpush.bf16.msra.mxu0 %v993
    %1011 = vmatpush.bf16.msra.mxu0 %v992
    %1012 = vmatpush.bf16.msra.mxu0 %v991
    %1013 = vmatpush.bf16.msra.mxu0 %v990
    %1014 = vmatmul.bf16.gmra.mxu0 %v937
    %v1015 = vpop.f32.mrf.mxu0
    %v1016 = vadd.f32 %v956, %v1015
    %v1017 = vpop.f32.mrf.mxu0
    %1018 = vdwg.mxu0
    %v1019 = vmax.f32 %v1016, 0.0
    %v1020 = vpack.c.bf16 %v1019, %v1019
    %v1021 = vld [vmem:[#allocation16] sm:$0xff]
    %v1022 = vld [vmem:[#allocation16 + $0x8] sm:$0xff]
    %v1023 = vld [vmem:[#allocation16 + $0x10] sm:$0xff]
    %v1024 = vld [vmem:[#allocation16 + $0x18] sm:$0xff]
    %v1025 = vld [vmem:[#allocation16 + $0x20] sm:$0xff]
    %v1026 = vld [vmem:[#allocation16 + $0x28] sm:$0xff]
    %v1027 = vld [vmem:[#allocation16 + $0x30] sm:$0xff]
    %v1028 = vld [vmem:[#allocation16 + $0x38] sm:$0xff]
    %v1029 = vld [vmem:[#allocation16 + $0x40] sm:$0xff]
    %v1030 = vld [vmem:[#allocation16 + $0x48] sm:$0xff]
    %v1031 = vld [vmem:[#allocation16 + $0x50] sm:$0xff]
    %v1032 = vld [vmem:[#allocation16 + $0x58] sm:$0xff]
    %v1033 = vld [vmem:[#allocation16 + $0x60] sm:$0xff]
    %v1034 = vld [vmem:[#allocation16 + $0x68] sm:$0xff]
    %v1035 = vld [vmem:[#allocation16 + $0x70] sm:$0xff]
    %v1036 = vld [vmem:[#allocation16 + $0x78] sm:$0xff]
    %v1037 = vld [vmem:[#allocation16 + $0x80] sm:$0xff]
    %v1038 = vld [vmem:[#allocation16 + $0x88] sm:$0xff]
    %v1039 = vld [vmem:[#allocation16 + $0x90] sm:$0xff]
    %v1040 = vld [vmem:[#allocation16 + $0x98] sm:$0xff]
    %v1041 = vld [vmem:[#allocation16 + $0xa0] sm:$0xff]
    %v1042 = vld [vmem:[#allocation16 + $0xa8] sm:$0xff]
    %v1043 = vld [vmem:[#allocation16 + $0xb0] sm:$0xff]
    %v1044 = vld [vmem:[#allocation16 + $0xb8] sm:$0xff]
    %v1045 = vld [vmem:[#allocation16 + $0xc0] sm:$0xff]
    %v1046 = vld [vmem:[#allocation16 + $0xc8] sm:$0xff]
    %v1047 = vld [vmem:[#allocation16 + $0xd0] sm:$0xff]
    %v1048 = vld [vmem:[#allocation16 + $0xd8] sm:$0xff]
    %v1049 = vld [vmem:[#allocation16 + $0xe0] sm:$0xff]
    %v1050 = vld [vmem:[#allocation16 + $0xe8] sm:$0xff]
    %v1051 = vld [vmem:[#allocation16 + $0xf0] sm:$0xff]
    %v1052 = vld [vmem:[#allocation16 + $0xf8] sm:$0xff]
    %v1053 = vld [vmem:[#allocation16 + $0x100] sm:$0xff]
    %v1054 = vld [vmem:[#allocation16 + $0x108] sm:$0xff]
    %v1055 = vld [vmem:[#allocation16 + $0x110] sm:$0xff]
    %v1056 = vld [vmem:[#allocation16 + $0x118] sm:$0xff]
    %v1057 = vld [vmem:[#allocation16 + $0x120] sm:$0xff]
    %v1058 = vld [vmem:[#allocation16 + $0x128] sm:$0xff]
    %v1059 = vld [vmem:[#allocation16 + $0x130] sm:$0xff]
    %v1060 = vld [vmem:[#allocation16 + $0x138] sm:$0xff]
    %v1061 = vld [vmem:[#allocation16 + $0x140] sm:$0xff]
    %v1062 = vld [vmem:[#allocation16 + $0x148] sm:$0xff]
    %v1063 = vld [vmem:[#allocation16 + $0x150] sm:$0xff]
    %v1064 = vld [vmem:[#allocation16 + $0x158] sm:$0xff]
    %v1065 = vld [vmem:[#allocation16 + $0x160] sm:$0xff]
    %v1066 = vld [vmem:[#allocation16 + $0x168] sm:$0xff]
    %v1067 = vld [vmem:[#allocation16 + $0x170] sm:$0xff]
    %v1068 = vld [vmem:[#allocation16 + $0x178] sm:$0xff]
    %v1069 = vld [vmem:[#allocation16 + $0x180] sm:$0xff]
    %v1070 = vld [vmem:[#allocation16 + $0x188] sm:$0xff]
    %v1071 = vld [vmem:[#allocation16 + $0x190] sm:$0xff]
    %v1072 = vld [vmem:[#allocation16 + $0x198] sm:$0xff]
    %v1073 = vld [vmem:[#allocation16 + $0x1a0] sm:$0xff]
    %v1074 = vld [vmem:[#allocation16 + $0x1a8] sm:$0xff]
    %v1075 = vld [vmem:[#allocation16 + $0x1b0] sm:$0xff]
    %v1076 = vld [vmem:[#allocation16 + $0x1b8] sm:$0xff]
    %v1077 = vld [vmem:[#allocation16 + $0x1c0] sm:$0xff]
    %v1078 = vld [vmem:[#allocation16 + $0x1c8] sm:$0xff]
    %v1079 = vld [vmem:[#allocation16 + $0x1d0] sm:$0xff]
    %v1080 = vld [vmem:[#allocation16 + $0x1d8] sm:$0xff]
    %v1081 = vld [vmem:[#allocation16 + $0x1e0] sm:$0xff]
    %v1082 = vld [vmem:[#allocation16 + $0x1e8] sm:$0xff]
    %v1083 = vld [vmem:[#allocation16 + $0x1f0] sm:$0xff]
    %v1084 = vld [vmem:[#allocation16 + $0x1f8] sm:$0xff]
    %v1085 = vld [vmem:[%s9] sm:$0xff]
    %v1087 = vperm.slane %v1085, 0
    %v1088 = vperm.slane %v1085, 1
    %v1089 = vperm.slane %v1085, 2
    %v1090 = vperm.slane %v1085, 3
    %v1091 = vperm.slane %v1085, 4
    %v1092 = vperm.slane %v1085, 5
    %v1093 = vperm.slane %v1085, 6
    %v1094 = vperm.slane %v1085, 7
    %v1167 = vunpack.c.l.b16 %v1021
    %v1168 = vunpack.c.h.b16 %v1021
    %v1169 = vunpack.c.l.b16 %v1022
    %v1170 = vunpack.c.h.b16 %v1022
    %v1171 = vunpack.c.l.b16 %v1023
    %v1172 = vunpack.c.h.b16 %v1023
    %v1173 = vunpack.c.l.b16 %v1024
    %v1174 = vunpack.c.h.b16 %v1024
    %v1175 = vunpack.c.l.b16 %v1025
    %v1176 = vunpack.c.h.b16 %v1025
    %v1177 = vunpack.c.l.b16 %v1026
    %v1178 = vunpack.c.h.b16 %v1026
    %v1179 = vunpack.c.l.b16 %v1027
    %v1180 = vunpack.c.h.b16 %v1027
    %v1181 = vunpack.c.l.b16 %v1028
    %v1182 = vunpack.c.h.b16 %v1028
    %v1183 = vunpack.c.l.b16 %v1029
    %v1184 = vunpack.c.h.b16 %v1029
    %v1185 = vunpack.c.l.b16 %v1030
    %v1186 = vunpack.c.h.b16 %v1030
    %v1187 = vunpack.c.l.b16 %v1031
    %v1188 = vunpack.c.h.b16 %v1031
    %v1189 = vunpack.c.l.b16 %v1032
    %v1190 = vunpack.c.h.b16 %v1032
    %v1191 = vunpack.c.l.b16 %v1033
    %v1192 = vunpack.c.h.b16 %v1033
    %v1193 = vunpack.c.l.b16 %v1034
    %v1194 = vunpack.c.h.b16 %v1034
    %v1195 = vunpack.c.l.b16 %v1035
    %v1196 = vunpack.c.h.b16 %v1035
    %v1197 = vunpack.c.l.b16 %v1036
    %v1198 = vunpack.c.h.b16 %v1036
    %v1199 = vunpack.c.l.b16 %v1037
    %v1200 = vunpack.c.h.b16 %v1037
    %v1201 = vunpack.c.l.b16 %v1038
    %v1202 = vunpack.c.h.b16 %v1038
    %v1203 = vunpack.c.l.b16 %v1039
    %v1204 = vunpack.c.h.b16 %v1039
    %v1205 = vunpack.c.l.b16 %v1040
    %v1206 = vunpack.c.h.b16 %v1040
    %v1207 = vunpack.c.l.b16 %v1041
    %v1208 = vunpack.c.h.b16 %v1041
    %v1209 = vunpack.c.l.b16 %v1042
    %v1210 = vunpack.c.h.b16 %v1042
    %v1211 = vunpack.c.l.b16 %v1043
    %v1212 = vunpack.c.h.b16 %v1043
    %v1213 = vunpack.c.l.b16 %v1044
    %v1214 = vunpack.c.h.b16 %v1044
    %v1215 = vunpack.c.l.b16 %v1045
    %v1216 = vunpack.c.h.b16 %v1045
    %v1217 = vunpack.c.l.b16 %v1046
    %v1218 = vunpack.c.h.b16 %v1046
    %v1219 = vunpack.c.l.b16 %v1047
    %v1220 = vunpack.c.h.b16 %v1047
    %v1221 = vunpack.c.l.b16 %v1048
    %v1222 = vunpack.c.h.b16 %v1048
    %v1223 = vunpack.c.l.b16 %v1049
    %v1224 = vunpack.c.h.b16 %v1049
    %v1225 = vunpack.c.l.b16 %v1050
    %v1226 = vunpack.c.h.b16 %v1050
    %v1227 = vunpack.c.l.b16 %v1051
    %v1228 = vunpack.c.h.b16 %v1051
    %v1229 = vunpack.c.l.b16 %v1052
    %v1230 = vunpack.c.h.b16 %v1052
    %v1231 = vunpack.c.l.b16 %v1053
    %v1232 = vunpack.c.h.b16 %v1053
    %v1233 = vunpack.c.l.b16 %v1054
    %v1234 = vunpack.c.h.b16 %v1054
    %v1235 = vunpack.c.l.b16 %v1055
    %v1236 = vunpack.c.h.b16 %v1055
    %v1237 = vunpack.c.l.b16 %v1056
    %v1238 = vunpack.c.h.b16 %v1056
    %v1239 = vunpack.c.l.b16 %v1057
    %v1240 = vunpack.c.h.b16 %v1057
    %v1241 = vunpack.c.l.b16 %v1058
    %v1242 = vunpack.c.h.b16 %v1058
    %v1243 = vunpack.c.l.b16 %v1059
    %v1244 = vunpack.c.h.b16 %v1059
    %v1245 = vunpack.c.l.b16 %v1060
    %v1246 = vunpack.c.h.b16 %v1060
    %v1247 = vunpack.c.l.b16 %v1061
    %v1248 = vunpack.c.h.b16 %v1061
    %v1249 = vunpack.c.l.b16 %v1062
    %v1250 = vunpack.c.h.b16 %v1062
    %v1251 = vunpack.c.l.b16 %v1063
    %v1252 = vunpack.c.h.b16 %v1063
    %v1253 = vunpack.c.l.b16 %v1064
    %v1254 = vunpack.c.h.b16 %v1064
    %v1255 = vunpack.c.l.b16 %v1065
    %v1256 = vunpack.c.h.b16 %v1065
    %v1257 = vunpack.c.l.b16 %v1066
    %v1258 = vunpack.c.h.b16 %v1066
    %v1259 = vunpack.c.l.b16 %v1067
    %v1260 = vunpack.c.h.b16 %v1067
    %v1261 = vunpack.c.l.b16 %v1068
    %v1262 = vunpack.c.h.b16 %v1068
    %v1263 = vunpack.c.l.b16 %v1069
    %v1264 = vunpack.c.h.b16 %v1069
    %v1265 = vunpack.c.l.b16 %v1070
    %v1266 = vunpack.c.h.b16 %v1070
    %v1267 = vunpack.c.l.b16 %v1071
    %v1268 = vunpack.c.h.b16 %v1071
    %v1269 = vunpack.c.l.b16 %v1072
    %v1270 = vunpack.c.h.b16 %v1072
    %v1271 = vunpack.c.l.b16 %v1073
    %v1272 = vunpack.c.h.b16 %v1073
    %v1273 = vunpack.c.l.b16 %v1074
    %v1274 = vunpack.c.h.b16 %v1074
    %v1275 = vunpack.c.l.b16 %v1075
    %v1276 = vunpack.c.h.b16 %v1075
    %v1277 = vunpack.c.l.b16 %v1076
    %v1278 = vunpack.c.h.b16 %v1076
    %v1279 = vunpack.c.l.b16 %v1077
    %v1280 = vunpack.c.h.b16 %v1077
    %v1281 = vunpack.c.l.b16 %v1078
    %v1282 = vunpack.c.h.b16 %v1078
    %v1283 = vunpack.c.l.b16 %v1079
    %v1284 = vunpack.c.h.b16 %v1079
    %v1285 = vunpack.c.l.b16 %v1080
    %v1286 = vunpack.c.h.b16 %v1080
    %v1287 = vunpack.c.l.b16 %v1081
    %v1288 = vunpack.c.h.b16 %v1081
    %v1289 = vunpack.c.l.b16 %v1082
    %v1290 = vunpack.c.h.b16 %v1082
    %v1291 = vunpack.c.l.b16 %v1083
    %v1292 = vunpack.c.h.b16 %v1083
    %v1293 = vunpack.c.l.b16 %v1084
    %v1294 = vunpack.c.h.b16 %v1084
    %v1295 = vpack.c.b16 %v1175, %v1167
    %v1296 = vpack.c.b16 %v1176, %v1168
    %v1297 = vpack.c.b16 %v1177, %v1169
    %v1298 = vpack.c.b16 %v1178, %v1170
    %v1299 = vpack.c.b16 %v1179, %v1171
    %v1300 = vpack.c.b16 %v1180, %v1172
    %v1301 = vpack.c.b16 %v1181, %v1173
    %v1302 = vpack.c.b16 %v1182, %v1174
    %v1303 = vpack.c.b16 %v1191, %v1183
    %v1304 = vpack.c.b16 %v1192, %v1184
    %v1305 = vpack.c.b16 %v1193, %v1185
    %v1306 = vpack.c.b16 %v1194, %v1186
    %v1307 = vpack.c.b16 %v1195, %v1187
    %v1308 = vpack.c.b16 %v1196, %v1188
    %v1309 = vpack.c.b16 %v1197, %v1189
    %v1310 = vpack.c.b16 %v1198, %v1190
    %v1311 = vpack.c.b16 %v1207, %v1199
    %v1312 = vpack.c.b16 %v1208, %v1200
    %v1313 = vpack.c.b16 %v1209, %v1201
    %v1314 = vpack.c.b16 %v1210, %v1202
    %v1315 = vpack.c.b16 %v1211, %v1203
    %v1316 = vpack.c.b16 %v1212, %v1204
    %v1317 = vpack.c.b16 %v1213, %v1205
    %v1318 = vpack.c.b16 %v1214, %v1206
    %v1319 = vpack.c.b16 %v1223, %v1215
    %v1320 = vpack.c.b16 %v1224, %v1216
    %v1321 = vpack.c.b16 %v1225, %v1217
    %v1322 = vpack.c.b16 %v1226, %v1218
    %v1323 = vpack.c.b16 %v1227, %v1219
    %v1324 = vpack.c.b16 %v1228, %v1220
    %v1325 = vpack.c.b16 %v1229, %v1221
    %v1326 = vpack.c.b16 %v1230, %v1222
    %v1327 = vpack.c.b16 %v1239, %v1231
    %v1328 = vpack.c.b16 %v1240, %v1232
    %v1329 = vpack.c.b16 %v1241, %v1233
    %v1330 = vpack.c.b16 %v1242, %v1234
    %v1331 = vpack.c.b16 %v1243, %v1235
    %v1332 = vpack.c.b16 %v1244, %v1236
    %v1333 = vpack.c.b16 %v1245, %v1237
    %v1334 = vpack.c.b16 %v1246, %v1238
    %v1335 = vpack.c.b16 %v1255, %v1247
    %v1336 = vpack.c.b16 %v1256, %v1248
    %v1337 = vpack.c.b16 %v1257, %v1249
    %v1338 = vpack.c.b16 %v1258, %v1250
    %v1339 = vpack.c.b16 %v1259, %v1251
    %v1340 = vpack.c.b16 %v1260, %v1252
    %v1341 = vpack.c.b16 %v1261, %v1253
    %v1342 = vpack.c.b16 %v1262, %v1254
    %v1343 = vpack.c.b16 %v1271, %v1263
    %v1344 = vpack.c.b16 %v1272, %v1264
    %v1345 = vpack.c.b16 %v1273, %v1265
    %v1346 = vpack.c.b16 %v1274, %v1266
    %v1347 = vpack.c.b16 %v1275, %v1267
    %v1348 = vpack.c.b16 %v1276, %v1268
    %v1349 = vpack.c.b16 %v1277, %v1269
    %v1350 = vpack.c.b16 %v1278, %v1270
    %v1351 = vpack.c.b16 %v1287, %v1279
    %v1352 = vpack.c.b16 %v1288, %v1280
    %v1353 = vpack.c.b16 %v1289, %v1281
    %v1354 = vpack.c.b16 %v1290, %v1282
    %v1355 = vpack.c.b16 %v1291, %v1283
    %v1356 = vpack.c.b16 %v1292, %v1284
    %v1357 = vpack.c.b16 %v1293, %v1285
    %v1358 = vpack.c.b16 %v1294, %v1286
    %1423 = vmatpush.bf16.msra.mxu0 %v1351
    %1424 = vmatpush.bf16.msra.mxu0 %v1343
    %1425 = vmatpush.bf16.msra.mxu0 %v1335
    %1426 = vmatpush.bf16.msra.mxu0 %v1327
    %1427 = vmatpush.bf16.msra.mxu0 %v1319
    %1428 = vmatpush.bf16.msra.mxu0 %v1311
    %1429 = vmatpush.bf16.msra.mxu0 %v1303
    %1430 = vmatpush.bf16.msra.mxu0 %v1295
    %1431 = vmatmul.bf16.gmra.mxu0 %v1020
    %v1432 = vpop.f32.mrf.mxu0
    %v1433 = vadd.f32 %v1087, %v1432
    %v1434 = vpop.f32.mrf.mxu0
    %1435 = vdwg.mxu0
    %1436 = vmatpush.bf16.msra.mxu0 %v1352
    %1437 = vmatpush.bf16.msra.mxu0 %v1344
    %1438 = vmatpush.bf16.msra.mxu0 %v1336
    %1439 = vmatpush.bf16.msra.mxu0 %v1328
    %1440 = vmatpush.bf16.msra.mxu0 %v1320
    %1441 = vmatpush.bf16.msra.mxu0 %v1312
    %1442 = vmatpush.bf16.msra.mxu0 %v1304
    %1443 = vmatpush.bf16.msra.mxu0 %v1296
    %1444 = vmatmul.bf16.gmra.mxu0 %v1020
    %v1445 = vpop.f32.mrf.mxu0
    %v1446 = vadd.f32 %v1088, %v1445
    %v1447 = vpop.f32.mrf.mxu0
    %1448 = vdwg.mxu0
    %1449 = vmatpush.bf16.msra.mxu0 %v1353
    %1450 = vmatpush.bf16.msra.mxu0 %v1345
    %1451 = vmatpush.bf16.msra.mxu0 %v1337
    %1452 = vmatpush.bf16.msra.mxu0 %v1329
    %1453 = vmatpush.bf16.msra.mxu0 %v1321
    %1454 = vmatpush.bf16.msra.mxu0 %v1313
    %1455 = vmatpush.bf16.msra.mxu0 %v1305
    %1456 = vmatpush.bf16.msra.mxu0 %v1297
    %1457 = vmatmul.bf16.gmra.mxu0 %v1020
    %v1458 = vpop.f32.mrf.mxu0
    %v1459 = vadd.f32 %v1089, %v1458
    %v1460 = vpop.f32.mrf.mxu0
    %1461 = vdwg.mxu0
    %1462 = vmatpush.bf16.msra.mxu0 %v1354
    %1463 = vmatpush.bf16.msra.mxu0 %v1346
    %1464 = vmatpush.bf16.msra.mxu0 %v1338
    %1465 = vmatpush.bf16.msra.mxu0 %v1330
    %1466 = vmatpush.bf16.msra.mxu0 %v1322
    %1467 = vmatpush.bf16.msra.mxu0 %v1314
    %1468 = vmatpush.bf16.msra.mxu0 %v1306
    %1469 = vmatpush.bf16.msra.mxu0 %v1298
    %1470 = vmatmul.bf16.gmra.mxu0 %v1020
    %v1471 = vpop.f32.mrf.mxu0
    %v1472 = vadd.f32 %v1090, %v1471
    %v1473 = vpop.f32.mrf.mxu0
    %1474 = vdwg.mxu0
    %1475 = vmatpush.bf16.msra.mxu0 %v1355
    %1476 = vmatpush.bf16.msra.mxu0 %v1347
    %1477 = vmatpush.bf16.msra.mxu0 %v1339
    %1478 = vmatpush.bf16.msra.mxu0 %v1331
    %1479 = vmatpush.bf16.msra.mxu0 %v1323
    %1480 = vmatpush.bf16.msra.mxu0 %v1315
    %1481 = vmatpush.bf16.msra.mxu0 %v1307
    %1482 = vmatpush.bf16.msra.mxu0 %v1299
    %1483 = vmatmul.bf16.gmra.mxu0 %v1020
    %v1484 = vpop.f32.mrf.mxu0
    %v1485 = vadd.f32 %v1091, %v1484
    %v1486 = vpop.f32.mrf.mxu0
    %1487 = vdwg.mxu0
    %1488 = vmatpush.bf16.msra.mxu0 %v1356
    %1489 = vmatpush.bf16.msra.mxu0 %v1348
    %1490 = vmatpush.bf16.msra.mxu0 %v1340
    %1491 = vmatpush.bf16.msra.mxu0 %v1332
    %1492 = vmatpush.bf16.msra.mxu0 %v1324
    %1493 = vmatpush.bf16.msra.mxu0 %v1316
    %1494 = vmatpush.bf16.msra.mxu0 %v1308
    %1495 = vmatpush.bf16.msra.mxu0 %v1300
    %1496 = vmatmul.bf16.gmra.mxu0 %v1020
    %v1497 = vpop.f32.mrf.mxu0
    %v1498 = vadd.f32 %v1092, %v1497
    %v1499 = vpop.f32.mrf.mxu0
    %1500 = vdwg.mxu0
    %1501 = vmatpush.bf16.msra.mxu0 %v1357
    %1502 = vmatpush.bf16.msra.mxu0 %v1349
    %1503 = vmatpush.bf16.msra.mxu0 %v1341
    %1504 = vmatpush.bf16.msra.mxu0 %v1333
    %1505 = vmatpush.bf16.msra.mxu0 %v1325
    %1506 = vmatpush.bf16.msra.mxu0 %v1317
    %1507 = vmatpush.bf16.msra.mxu0 %v1309
    %1508 = vmatpush.bf16.msra.mxu0 %v1301
    %1509 = vmatmul.bf16.gmra.mxu0 %v1020
    %v1510 = vpop.f32.mrf.mxu0
    %v1511 = vadd.f32 %v1093, %v1510
    %v1512 = vpop.f32.mrf.mxu0
    %1513 = vdwg.mxu0
    %1514 = vmatpush.bf16.msra.mxu0 %v1358
    %1515 = vmatpush.bf16.msra.mxu0 %v1350
    %1516 = vmatpush.bf16.msra.mxu0 %v1342
    %1517 = vmatpush.bf16.msra.mxu0 %v1334
    %1518 = vmatpush.bf16.msra.mxu0 %v1326
    %1519 = vmatpush.bf16.msra.mxu0 %v1318
    %1520 = vmatpush.bf16.msra.mxu0 %v1310
    %1521 = vmatpush.bf16.msra.mxu0 %v1302
    %1522 = vmatmul.bf16.gmra.mxu0 %v1020
    %v1523 = vpop.f32.mrf.mxu0
    %v1524 = vadd.f32 %v1094, %v1523
    %v1525 = vpop.f32.mrf.mxu0
    %1526 = vdwg.mxu0
    %v1527 = vxor.u32 %v1433, 2147483648
    %v1528 = vxor.u32 %v1446, 2147483648
    %v1529 = vxor.u32 %v1459, 2147483648
    %v1530 = vxor.u32 %v1472, 2147483648
    %v1531 = vxor.u32 %v1485, 2147483648
    %v1532 = vxor.u32 %v1498, 2147483648
    %v1533 = vxor.u32 %v1511, 2147483648
    %v1534 = vxor.u32 %v1524, 2147483648
    %v1535 = vmul.f32 %v1527, 1.442695
    %v1536 = vpow.pop %v1535
    %v1537 = vmul.f32 %v1528, 1.442695
    %v1538 = vpow.pop %v1537
    %v1539 = vmul.f32 %v1529, 1.442695
    %v1540 = vpow.pop %v1539
    %v1541 = vmul.f32 %v1530, 1.442695
    %v1542 = vpow.pop %v1541
    %v1543 = vmul.f32 %v1531, 1.442695
    %v1544 = vpow.pop %v1543
    %v1545 = vmul.f32 %v1532, 1.442695
    %v1546 = vpow.pop %v1545
    %v1547 = vmul.f32 %v1533, 1.442695
    %v1548 = vpow.pop %v1547
    %v1549 = vmul.f32 %v1534, 1.442695
    %v1550 = vpow.pop %v1549
    %v1551 = vadd.f32 %v1536, 1.0
    %v1552 = vadd.f32 %v1538, 1.0
    %v1553 = vadd.f32 %v1540, 1.0
    %v1554 = vadd.f32 %v1542, 1.0
    %v1555 = vadd.f32 %v1544, 1.0
    %v1556 = vadd.f32 %v1546, 1.0
    %v1557 = vadd.f32 %v1548, 1.0
    %v1558 = vadd.f32 %v1550, 1.0
    %v1559 = vrcp.pop %v1551
    %v1560 = vmul.f32 %v1551, %v1559
    %v1561 = vsub.f32 1.0, %v1560
    %v1562 = vmul.f32 %v1559, %v1561
    %v1563 = vadd.f32 %v1559, %v1562
    %vm1564 = vweird.f32 %v1551
    %vm1565 = vweird.f32 %v1559
    %vm1566 = vmor %vm1564, %vm1565
    %v1567 = vsel %vm1566, %v1559, %v1563
    %v1568 = vand.u32 2147483647, %v1551
    %vm1569 = vcmp.eq.f32.partialorder %v1568, 8.507059e+37
    %v1570 = vand.u32 %v1551, 2147483648
    %v1571 = vor.u32 1.1754944e-38, %v1570
    %v1572 = vsel %vm1569, %v1571, %v1567
    %v1573 = vmul.f32 1.0, %v1572
    %v1574 = vrcp.pop %v1552
    %v1575 = vmul.f32 %v1552, %v1574
    %v1576 = vsub.f32 1.0, %v1575
    %v1577 = vmul.f32 %v1574, %v1576
    %v1578 = vadd.f32 %v1574, %v1577
    %vm1579 = vweird.f32 %v1552
    %vm1580 = vweird.f32 %v1574
    %vm1581 = vmor %vm1579, %vm1580
    %v1582 = vsel %vm1581, %v1574, %v1578
    %v1583 = vand.u32 2147483647, %v1552
    %vm1584 = vcmp.eq.f32.partialorder %v1583, 8.507059e+37
    %v1585 = vand.u32 %v1552, 2147483648
    %v1586 = vor.u32 1.1754944e-38, %v1585
    %v1587 = vsel %vm1584, %v1586, %v1582
    %v1588 = vmul.f32 1.0, %v1587
    %v1589 = vrcp.pop %v1553
    %v1590 = vmul.f32 %v1553, %v1589
    %v1591 = vsub.f32 1.0, %v1590
    %v1592 = vmul.f32 %v1589, %v1591
    %v1593 = vadd.f32 %v1589, %v1592
    %vm1594 = vweird.f32 %v1553
    %vm1595 = vweird.f32 %v1589
    %vm1596 = vmor %vm1594, %vm1595
    %v1597 = vsel %vm1596, %v1589, %v1593
    %v1598 = vand.u32 2147483647, %v1553
    %vm1599 = vcmp.eq.f32.partialorder %v1598, 8.507059e+37
    %v1600 = vand.u32 %v1553, 2147483648
    %v1601 = vor.u32 1.1754944e-38, %v1600
    %v1602 = vsel %vm1599, %v1601, %v1597
    %v1603 = vmul.f32 1.0, %v1602
    %v1604 = vrcp.pop %v1554
    %v1605 = vmul.f32 %v1554, %v1604
    %v1606 = vsub.f32 1.0, %v1605
    %v1607 = vmul.f32 %v1604, %v1606
    %v1608 = vadd.f32 %v1604, %v1607
    %vm1609 = vweird.f32 %v1554
    %vm1610 = vweird.f32 %v1604
    %vm1611 = vmor %vm1609, %vm1610
    %v1612 = vsel %vm1611, %v1604, %v1608
    %v1613 = vand.u32 2147483647, %v1554
    %vm1614 = vcmp.eq.f32.partialorder %v1613, 8.507059e+37
    %v1615 = vand.u32 %v1554, 2147483648
    %v1616 = vor.u32 1.1754944e-38, %v1615
    %v1617 = vsel %vm1614, %v1616, %v1612
    %v1618 = vmul.f32 1.0, %v1617
    %v1619 = vrcp.pop %v1555
    %v1620 = vmul.f32 %v1555, %v1619
    %v1621 = vsub.f32 1.0, %v1620
    %v1622 = vmul.f32 %v1619, %v1621
    %v1623 = vadd.f32 %v1619, %v1622
    %vm1624 = vweird.f32 %v1555
    %vm1625 = vweird.f32 %v1619
    %vm1626 = vmor %vm1624, %vm1625
    %v1627 = vsel %vm1626, %v1619, %v1623
    %v1628 = vand.u32 2147483647, %v1555
    %vm1629 = vcmp.eq.f32.partialorder %v1628, 8.507059e+37
    %v1630 = vand.u32 %v1555, 2147483648
    %v1631 = vor.u32 1.1754944e-38, %v1630
    %v1632 = vsel %vm1629, %v1631, %v1627
    %v1633 = vmul.f32 1.0, %v1632
    %v1634 = vrcp.pop %v1556
    %v1635 = vmul.f32 %v1556, %v1634
    %v1636 = vsub.f32 1.0, %v1635
    %v1637 = vmul.f32 %v1634, %v1636
    %v1638 = vadd.f32 %v1634, %v1637
    %vm1639 = vweird.f32 %v1556
    %vm1640 = vweird.f32 %v1634
    %vm1641 = vmor %vm1639, %vm1640
    %v1642 = vsel %vm1641, %v1634, %v1638
    %v1643 = vand.u32 2147483647, %v1556
    %vm1644 = vcmp.eq.f32.partialorder %v1643, 8.507059e+37
    %v1645 = vand.u32 %v1556, 2147483648
    %v1646 = vor.u32 1.1754944e-38, %v1645
    %v1647 = vsel %vm1644, %v1646, %v1642
    %v1648 = vmul.f32 1.0, %v1647
    %v1649 = vrcp.pop %v1557
    %v1650 = vmul.f32 %v1557, %v1649
    %v1651 = vsub.f32 1.0, %v1650
    %v1652 = vmul.f32 %v1649, %v1651
    %v1653 = vadd.f32 %v1649, %v1652
    %vm1654 = vweird.f32 %v1557
    %vm1655 = vweird.f32 %v1649
    %vm1656 = vmor %vm1654, %vm1655
    %v1657 = vsel %vm1656, %v1649, %v1653
    %v1658 = vand.u32 2147483647, %v1557
    %vm1659 = vcmp.eq.f32.partialorder %v1658, 8.507059e+37
    %v1660 = vand.u32 %v1557, 2147483648
    %v1661 = vor.u32 1.1754944e-38, %v1660
    %v1662 = vsel %vm1659, %v1661, %v1657
    %v1663 = vmul.f32 1.0, %v1662
    %v1664 = vrcp.pop %v1558
    %v1665 = vmul.f32 %v1558, %v1664
    %v1666 = vsub.f32 1.0, %v1665
    %v1667 = vmul.f32 %v1664, %v1666
    %v1668 = vadd.f32 %v1664, %v1667
    %vm1669 = vweird.f32 %v1558
    %vm1670 = vweird.f32 %v1664
    %vm1671 = vmor %vm1669, %vm1670
    %v1672 = vsel %vm1671, %v1664, %v1668
    %v1673 = vand.u32 2147483647, %v1558
    %vm1674 = vcmp.eq.f32.partialorder %v1673, 8.507059e+37
    %v1675 = vand.u32 %v1558, 2147483648
    %v1676 = vor.u32 1.1754944e-38, %v1675
    %v1677 = vsel %vm1674, %v1676, %v1672
    %v1678 = vmul.f32 1.0, %v1677
    %1679 = vst [vmem:[#allocation17] sm:$0xff] %v1573
    %1680 = vst [vmem:[#allocation17 + $0x8] sm:$0xff] %v1588
    %1681 = vst [vmem:[#allocation17 + $0x10] sm:$0xff] %v1603
    %1682 = vst [vmem:[#allocation17 + $0x18] sm:$0xff] %v1618
    %1683 = vst [vmem:[#allocation17 + $0x20] sm:$0xff] %v1633
    %1684 = vst [vmem:[#allocation17 + $0x28] sm:$0xff] %v1648
    %1685 = vst [vmem:[#allocation17 + $0x30] sm:$0xff] %v1663
    %1686 = vst [vmem:[#allocation17 + $0x38] sm:$0xff] %v1678
    // Predicated region
    $region78: #{tpu_custom_call.1} parent=1 // pred_check
      _
    $region79: #{tpu_custom_call.1} parent=1 // pred_check_branch
      %1688 = sbr.rel (0) target = $region81
    $region80: #{tpu_custom_call.1} parent=1 // pred_region
      %1690 = vsyncadd [#allocation4], 0
      %s1692 = sshll.u32 [#allocation17], 4
      %s1693 = int_to_ptr.vmem [resolvable:$true] %s1692
      %s1694 = sshll.u32 %s10, 4
      %s1695 = int_to_ptr.hbm [resolvable:$true] %s1694
      %1697 = dma.vmem_to_hbm [thread:$0]  %s1693, 1024, %s1695, [#allocation4]
    $region81: #{tpu_custom_call.1} parent=1 // pred_fallthru
      _
    // Predicated region
    $region82: #{tpu_custom_call.1} parent=1 // pred_check
      _
    $region83: #{tpu_custom_call.1} parent=1 // pred_check_branch
      %1699 = sbr.rel (0) target = $region85
    $region84: #{tpu_custom_call.1} parent=1 // pred_region
      %1701 = vsyncadd [#allocation19], 0
      %s1703 = sshll.u32 [#allocation18], 4
      %s1704 = int_to_ptr.vmem [resolvable:$true] %s1703
      %s1705 = sshll.u32 %s11, 4
      %s1706 = int_to_ptr.hbm [resolvable:$true] %s1705
      %1708 = dma.vmem_to_hbm [thread:$0]  %s1704, 1024, %s1706, [#allocation19]
    $region85: #{tpu_custom_call.1} parent=1 // pred_fallthru
      _
    // Predicated region
    $region86: #{tpu_custom_call.1} parent=1 // pred_check
      _
    $region87: #{tpu_custom_call.1} parent=1 // pred_check_branch
      %1710 = sbr.rel (0) target = $region89
    $region88: #{tpu_custom_call.1} parent=1 // pred_region
      %1712 = dma.done [#allocation4], 1024
    $region89: #{tpu_custom_call.1} parent=1 // pred_fallthru
      _
    // Predicated region
    $region90: #{tpu_custom_call.1} parent=1 // pred_check
      _
    $region91: #{tpu_custom_call.1} parent=1 // pred_check_branch
      %1714 = sbr.rel (0) target = $region93
    $region92: #{tpu_custom_call.1} parent=1 // pred_region
      %1716 = dma.done [#allocation19], 1024
    $region93: #{tpu_custom_call.1} parent=1 // pred_fallthru
      _
    %1717 = vsyncpa [#allocation3], 1
    %1718 = vsyncpa [#allocation6], 1
    %1719 = vsyncpa [#allocation9], 1
    %1720 = vsyncpa [#allocation12], 1
    %1721 = vsyncpa [#allocation15], 1
    %1722 = vsyncpa [#allocation4], 1
    %1723 = vsyncpa [#allocation19], 1

</llo_original>
